<compile_context>
chip_gen: v7x
topology: tpu7x:2x2x1
jax: 0.10.0
libtpu: 0.0.40
codegen_flags: <defaults>
</compile_context>

<pallas_src>
import jax
import jax.numpy as jnp
import numpy as np
from jax.experimental import pallas as pl
from jax.experimental.pallas import tpu as pltpu

# ----- small, module-consistent hyperparameters -----
ENC_HID = 16                   # constructor `hidden_size`
NUM_DIRECTIONS = 2             # encoder.num_directions
H = ENC_HID * NUM_DIRECTIONS   # self.hidden_size = 32
V = 20                         # output_size (vocab)
L = 8                          # max_length (MAX_LEN shrunk for the example)
T = 6                          # decode steps folded into one kernel launch
B = 16                         # total batch of independent decode hypotheses
BB = 8                         # batch rows per grid block (one full sublane group)
LP = 128                       # attention length padded to full lane width
VP = 128                       # vocab padded to full lane width
NEG = -1e30                    # bias pad value -> exp() underflows to exactly 0.0 in f32

# TODO(synk): nn.Dropout is identity in eval mode; training-mode stochastic dropout
# (pltpu.prng_*) is not implemented here.
# TODO(synk): greedy (argmax-feedback) decoding is not implemented; tokens are given
# (teacher forcing), matching repeated applications of the module's forward().

# ----- row offsets inside the packed weight slabs (all section starts multiple of 8) -----
# slab128: lane width 128
R128_ATTN_E = 0                 # rows [0,H):   W_attn[:H]   -> lanes [0,L)
R128_ATTN_H = H                 # rows [H,2H):  W_attn[H:2H] -> lanes [0,L)
R128_ATTN_B = 2 * H             # row 2H:       b_attn in lanes [0,L), -1e30 elsewhere
R128_OUT_W = 2 * H + 8          # rows [72,104): W_out       -> lanes [0,V)
R128_OUT_B = R128_OUT_W + H     # row 104:      b_out in lanes [0,V), -1e30 elsewhere
R128_ROWS = R128_OUT_B + 8      # 112

# slab32: lane width H = 32
R32_COMB_E = 0
R32_COMB_A = H
R32_IH_R = 2 * H
R32_IH_Z = 3 * H
R32_IH_N = 4 * H
R32_HH_R = 5 * H
R32_HH_Z = 6 * H
R32_HH_N = 7 * H
R32_BIAS = 8 * H                # +0 b_comb, +1..+3 b_ih (r,z,n), +4..+6 b_hh (r,z,n)
R32_ROWS = R32_BIAS + 8         # 264


def attn_decoder_seq_kernel(emb_ref, h0_ref, enc_ref, w128_ref, w32_ref,
                            logp_ref, attn_ref, hfin_ref, h_scr):
    t = pl.program_id(1)

    # (Re)initialize the carried hidden state at the first decode step of each batch block.
    @pl.when(t == 0)
    def _():
        h_scr[...] = h0_ref[...]

    emb = emb_ref[...].reshape(BB, H)      # embedded tokens for this step (dropout = identity)
    h = h_scr[...]                         # (BB, H) current hidden

    # --- attn_weights = softmax(Linear_{2H->L}(cat(emb, h))); softmax over 128 padded lanes,
    #     lanes >= L carry a -1e30 bias so they contribute exactly 0 ---
    scores = (jnp.dot(emb, w128_ref[R128_ATTN_E:R128_ATTN_E + H, :],
                      preferred_element_type=jnp.float32)
              + jnp.dot(h, w128_ref[R128_ATTN_H:R128_ATTN_H + H, :],
                        preferred_element_type=jnp.float32)
              + w128_ref[R128_ATTN_B:R128_ATTN_B + 1, :])
    m = jnp.max(scores, axis=1, keepdims=True)
    e = jnp.exp(scores - m)
    attn_w = e / jnp.sum(e, axis=1, keepdims=True)        # (BB, 128); lanes >= L are 0
    attn_ref[...] = attn_w.reshape(1, BB, LP)             # lane-dense (unmasked) store

    # --- attn_applied = attn_w @ encoder_outputs (enc rows >= L are zero) ---
    attn_applied = jnp.dot(attn_w, enc_ref[...], preferred_element_type=jnp.float32)  # (BB, H)

    # --- attn_combine(cat(emb, attn_applied)) + ReLU ---
    x = (jnp.dot(emb, w32_ref[R32_COMB_E:R32_COMB_E + H, :],
                 preferred_element_type=jnp.float32)
         + jnp.dot(attn_applied, w32_ref[R32_COMB_A:R32_COMB_A + H, :],
                   preferred_element_type=jnp.float32)
         + w32_ref[R32_BIAS:R32_BIAS + 1, :])
    x = jnp.maximum(x, 0.0)

    # --- single-step GRU with gate-separated weights (PyTorch gate order r, z, n) ---
    def mm(a, row0):
        return jnp.dot(a, w32_ref[row0:row0 + H, :], preferred_element_type=jnp.float32)

    i_r = mm(x, R32_IH_R) + w32_ref[R32_BIAS + 1:R32_BIAS + 2, :]
    i_z = mm(x, R32_IH_Z) + w32_ref[R32_BIAS + 2:R32_BIAS + 3, :]
    i_n = mm(x, R32_IH_N) + w32_ref[R32_BIAS + 3:R32_BIAS + 4, :]
    h_r = mm(h, R32_HH_R) + w32_ref[R32_BIAS + 4:R32_BIAS + 5, :]
    h_z = mm(h, R32_HH_Z) + w32_ref[R32_BIAS + 5:R32_BIAS + 6, :]
    h_n = mm(h, R32_HH_N) + w32_ref[R32_BIAS + 6:R32_BIAS + 7, :]
    r = jax.nn.sigmoid(i_r + h_r)
    z = jax.nn.sigmoid(i_z + h_z)
    n = jnp.tanh(i_n + r * h_n)
    h_new = (1.0 - z) * n + z * h                          # (BB, H)
    h_scr[...] = h_new                                     # carry to next decode step
    hfin_ref[...] = h_new                                  # resident block; last step survives

    # --- output head + log_softmax over 128 padded lanes (lanes >= V biased to -1e30) ---
    logits = (jnp.dot(h_new, w128_ref[R128_OUT_W:R128_OUT_W + H, :],
                      preferred_element_type=jnp.float32)
              + w128_ref[R128_OUT_B:R128_OUT_B + 1, :])
    lm = jnp.max(logits, axis=1, keepdims=True)
    shifted = logits - lm
    logp = shifted - jnp.log(jnp.sum(jnp.exp(shifted), axis=1, keepdims=True))
    logp_ref[...] = logp.reshape(1, BB, VP)                # lane-dense (unmasked) store


def pack_weight_slabs(params):
    """Pack all weights/biases into two lane-aligned slabs (built once on the host)."""
    w_attn = np.asarray(params["w_attn"], np.float32)
    w_comb = np.asarray(params["w_comb"], np.float32)
    w_ih = np.asarray(params["w_ih"], np.float32)
    w_hh = np.asarray(params["w_hh"], np.float32)

    s128 = np.zeros((R128_ROWS, 128), np.float32)
    s128[R128_ATTN_E:R128_ATTN_E + H, :L] = w_attn[:H]
    s128[R128_ATTN_H:R128_ATTN_H + H, :L] = w_attn[H:2 * H]
    s128[R128_ATTN_B, :] = NEG
    s128[R128_ATTN_B, :L] = np.asarray(params["b_attn"], np.float32)[0]
    s128[R128_OUT_W:R128_OUT_W + H, :V] = np.asarray(params["w_out"], np.float32)
    s128[R128_OUT_B, :] = NEG
    s128[R128_OUT_B, :V] = np.asarray(params["b_out"], np.float32)[0]

    s32 = np.zeros((R32_ROWS, H), np.float32)
    s32[R32_COMB_E:R32_COMB_E + H] = w_comb[:H]
    s32[R32_COMB_A:R32_COMB_A + H] = w_comb[H:2 * H]
    s32[R32_IH_R:R32_IH_R + H] = w_ih[:, 0:H]
    s32[R32_IH_Z:R32_IH_Z + H] = w_ih[:, H:2 * H]
    s32[R32_IH_N:R32_IH_N + H] = w_ih[:, 2 * H:]
    s32[R32_HH_R:R32_HH_R + H] = w_hh[:, 0:H]
    s32[R32_HH_Z:R32_HH_Z + H] = w_hh[:, H:2 * H]
    s32[R32_HH_N:R32_HH_N + H] = w_hh[:, 2 * H:]
    b_ih = np.asarray(params["b_ih"], np.float32)[0]
    b_hh = np.asarray(params["b_hh"], np.float32)[0]
    s32[R32_BIAS + 0] = np.asarray(params["b_comb"], np.float32)[0]
    s32[R32_BIAS + 1] = b_ih[0:H]
    s32[R32_BIAS + 2] = b_ih[H:2 * H]
    s32[R32_BIAS + 3] = b_ih[2 * H:]
    s32[R32_BIAS + 4] = b_hh[0:H]
    s32[R32_BIAS + 5] = b_hh[H:2 * H]
    s32[R32_BIAS + 6] = b_hh[2 * H:]
    return jnp.asarray(s128), jnp.asarray(s32)


def attn_decoder_forward_seq(tokens, h0, encoder_outputs, params):
    """Run the module's forward for T decode steps over B independent hypotheses that
    share one `encoder_outputs` (teacher forcing: the token at each step is given).

    tokens: (T, B) int32;  h0: (B, H) f32;  encoder_outputs: (L, H) f32.
    Returns (log_probs (T, B, V), hidden (1, B, H), attn_weights (T, B, L)).
    """
    T_, B_ = tokens.shape
    assert B_ % BB == 0
    nb = B_ // BB

    # Embedding lookup for the whole sequence (eval-mode dropout = identity); the kernel
    # then consumes one pipelined (1, BB, H) block per step — no gather on the critical path.
    emb_seq = jnp.asarray(params["embedding"], jnp.float32)[tokens]        # (T, B, H)
    enc_pad = jnp.zeros((LP, H), jnp.float32).at[:L, :].set(encoder_outputs)
    s128, s32 = pack_weight_slabs(params)

    grid_spec = pltpu.PrefetchScalarGridSpec(
        num_scalar_prefetch=0,
        grid=(nb, T_),
        in_specs=[
            pl.BlockSpec((1, BB, H), lambda b, t: (t, b, 0)),       # embedded tokens, per step
            pl.BlockSpec((BB, H), lambda b, t: (b, 0)),             # initial hidden, per batch block
            pl.BlockSpec((LP, H), lambda b, t: (0, 0)),             # padded encoder outputs (resident)
            pl.BlockSpec((R128_ROWS, 128), lambda b, t: (0, 0)),    # weight slab, 128-lane (resident)
            pl.BlockSpec((R32_ROWS, H), lambda b, t: (0, 0)),       # weight slab, 32-lane (resident)
        ],
        out_specs=[
            pl.BlockSpec((1, BB, VP), lambda b, t: (t, b, 0)),      # log-probs (lane padded)
            pl.BlockSpec((1, BB, LP), lambda b, t: (t, b, 0)),      # attention weights (lane padded)
            pl.BlockSpec((BB, H), lambda b, t: (b, 0)),             # final hidden per batch block
        ],
        scratch_shapes=[pltpu.VMEM((BB, H), jnp.float32)],          # carried GRU hidden state
    )

    flops = 2 * B_ * T_ * (2 * H * LP + LP * H + 2 * H * H + 6 * H * H + H * VP)
    bytes_accessed = 4 * (s128.size + s32.size + enc_pad.size + emb_seq.size + h0.size
                          + T_ * B_ * (VP + LP) + B_ * H)
    cost = pl.CostEstimate(flops=int(flops),
                           transcendentals=int(B_ * T_ * (LP + VP + 4 * H)),
                           bytes_accessed=int(bytes_accessed))

    logp_pad, attn_pad, h_fin = pl.pallas_call(
        attn_decoder_seq_kernel,
        out_shape=(
            jax.ShapeDtypeStruct((T_, B_, VP), jnp.float32),
            jax.ShapeDtypeStruct((T_, B_, LP), jnp.float32),
            jax.ShapeDtypeStruct((B_, H), jnp.float32),
        ),
        grid_spec=grid_spec,
        compiler_params=pltpu.CompilerParams(
            dimension_semantics=("parallel", "arbitrary")),
        cost_estimate=cost,
    )(emb_seq, h0, enc_pad, s128, s32)

    return logp_pad[:, :, :V], h_fin[None], attn_pad[:, :, :L]


def make_params(key):
    ks = jax.random.split(key, 12)
    s = 0.1
    return {
        "embedding": s * jax.random.normal(ks[0], (V, H), jnp.float32),
        "w_attn":    s * jax.random.normal(ks[1], (2 * H, L), jnp.float32),
        "b_attn":    s * jax.random.normal(ks[2], (1, L), jnp.float32),
        "w_comb":    s * jax.random.normal(ks[3], (2 * H, H), jnp.float32),
        "b_comb":    s * jax.random.normal(ks[4], (1, H), jnp.float32),
        "w_ih":      s * jax.random.normal(ks[5], (H, 3 * H), jnp.float32),
        "b_ih":      s * jax.random.normal(ks[6], (1, 3 * H), jnp.float32),
        "w_hh":      s * jax.random.normal(ks[7], (H, 3 * H), jnp.float32),
        "b_hh":      s * jax.random.normal(ks[8], (1, 3 * H), jnp.float32),
        "w_out":     s * jax.random.normal(ks[9], (H, V), jnp.float32),
        "b_out":     s * jax.random.normal(ks[10], (1, V), jnp.float32),
    }


def reference_forward_seq(tokens, h0, enc, p):
    """Pure-JAX reference: the PyTorch forward (eval mode) applied step by step."""
    def step(h, tok):
        emb = p["embedding"][tok]                                        # (B, H)
        hi = jnp.concatenate([emb, h], axis=1)                           # (B, 2H)
        attn_w = jax.nn.softmax(hi @ p["w_attn"] + p["b_attn"], axis=1)  # (B, L)
        attn_applied = attn_w @ enc                                      # (B, H)
        x = jax.nn.relu(jnp.concatenate([emb, attn_applied], axis=1) @ p["w_comb"] + p["b_comb"])
        gi = x @ p["w_ih"] + p["b_ih"]
        gh = h @ p["w_hh"] + p["b_hh"]
        r = jax.nn.sigmoid(gi[:, :H] + gh[:, :H])
        z = jax.nn.sigmoid(gi[:, H:2 * H] + gh[:, H:2 * H])
        n = jnp.tanh(gi[:, 2 * H:] + r * gh[:, 2 * H:])
        h_new = (1.0 - z) * n + z * h
        logp = jax.nn.log_softmax(h_new @ p["w_out"] + p["b_out"], axis=1)
        return h_new, (logp, attn_w)

    h_fin, (logps, attns) = jax.lax.scan(step, h0, tokens)
    return logps, h_fin[None], attns


if __name__ == "__main__":
    key = jax.random.PRNGKey(0)
    k_p, k_h, k_e, k_t = jax.random.split(key, 4)

    params = make_params(k_p)
    tokens = jax.random.randint(k_t, (T, B), 0, V, dtype=jnp.int32)      # decoder inputs (teacher forcing)
    h0 = 0.1 * jax.random.normal(k_h, (B, H), jnp.float32)
    encoder_outputs = 0.1 * jax.random.normal(k_e, (L, H), jnp.float32)

    logp, h_fin, attn_w = attn_decoder_forward_seq(tokens, h0, encoder_outputs, params)
    jax.block_until_ready((logp, h_fin, attn_w))

    ref_logp, ref_h, ref_w = reference_forward_seq(tokens, h0, encoder_outputs, params)
    np.testing.assert_allclose(np.asarray(logp), np.asarray(ref_logp), rtol=2e-5, atol=2e-5)
    np.testing.assert_allclose(np.asarray(h_fin), np.asarray(ref_h), rtol=2e-5, atol=2e-5)
    np.testing.assert_allclose(np.asarray(attn_w), np.asarray(ref_w), rtol=2e-5, atol=2e-5)

    print("KERNEL_OK")
</pallas_src>

<mosaic_0001>
module attributes {stable_mosaic.version = 11 : i64} {
  func.func @attn_decoder_seq_kernel(%arg0: i32, %arg1: i32, %arg2: memref<1x8x32xf32, #tpu.memory_space<vmem>>, %arg3: memref<8x32xf32, #tpu.memory_space<vmem>>, %arg4: memref<128x32xf32, #tpu.memory_space<vmem>>, %arg5: memref<112x128xf32, #tpu.memory_space<vmem>>, %arg6: memref<264x32xf32, #tpu.memory_space<vmem>>, %arg7: memref<1x8x128xf32, #tpu.memory_space<vmem>>, %arg8: memref<1x8x128xf32, #tpu.memory_space<vmem>>, %arg9: memref<8x32xf32, #tpu.memory_space<vmem>>, %arg10: memref<8x32xf32, #tpu.memory_space<vmem>>) attributes {dimension_semantics = [#tpu.dimension_semantics<parallel>, #tpu.dimension_semantics<arbitrary>], iteration_bounds = array<i64: 2, 6>, scalar_prefetch = 0 : i64, scratch_operands = 1 : i64, tpu.core_type = #tpu.core_type<tc>, window_params = [{transform_indices = @transform_0, window_bounds = array<i64: 1, 8, 32>}, {transform_indices = @transform_1, window_bounds = array<i64: 8, 32>}, {pipeline_mode = #tpu.pipeline_mode<synchronous>, transform_indices = @transform_2, window_bounds = array<i64: 128, 32>}, {pipeline_mode = #tpu.pipeline_mode<synchronous>, transform_indices = @transform_3, window_bounds = array<i64: 112, 128>}, {pipeline_mode = #tpu.pipeline_mode<synchronous>, transform_indices = @transform_4, window_bounds = array<i64: 264, 32>}, {transform_indices = @transform_5, window_bounds = array<i64: 1, 8, 128>}, {transform_indices = @transform_6, window_bounds = array<i64: 1, 8, 128>}, {transform_indices = @transform_7, window_bounds = array<i64: 8, 32>}]} {
    %c0_i32 = arith.constant 0 : i32
    %0 = arith.cmpi eq, %arg1, %c0_i32 : i32
    %1 = arith.extui %0 : i1 to i32
    %c0_i32_0 = arith.constant 0 : i32
    %2 = arith.cmpi ne, %1, %c0_i32_0 : i32
    scf.if %2 {
      %c0_60 = arith.constant 0 : index
      %c0_61 = arith.constant 0 : index
      %106 = vector.load %arg3[%c0_60, %c0_61] : memref<8x32xf32, #tpu.memory_space<vmem>>, vector<8x32xf32>
      %c0_62 = arith.constant 0 : index
      %c0_63 = arith.constant 0 : index
      %107 = vector.load %arg10[%c0_62, %c0_63] : memref<8x32xf32, #tpu.memory_space<vmem>>, vector<8x32xf32>
      tpu.vector_store %arg10[%c0_62, %c0_63], %106 {strides = array<i32>} : memref<8x32xf32, #tpu.memory_space<vmem>>, vector<8x32xf32>,
    } else {
    }
    %c0 = arith.constant 0 : index
    %c0_1 = arith.constant 0 : index
    %c0_2 = arith.constant 0 : index
    %3 = vector.load %arg2[%c0, %c0_1, %c0_2] : memref<1x8x32xf32, #tpu.memory_space<vmem>>, vector<1x8x32xf32>
    %4 = vector.shape_cast %3 : vector<1x8x32xf32> to vector<8x32xf32>
    %c0_3 = arith.constant 0 : index
    %c0_4 = arith.constant 0 : index
    %5 = vector.load %arg10[%c0_3, %c0_4] : memref<8x32xf32, #tpu.memory_space<vmem>>, vector<8x32xf32>
    %c0_5 = arith.constant 0 : index
    %c0_6 = arith.constant 0 : index
    %6 = vector.load %arg5[%c0_5, %c0_6] : memref<112x128xf32, #tpu.memory_space<vmem>>, vector<32x128xf32>
    %cst = arith.constant dense<0.000000e+00> : vector<8x128xf32>
    %7 = tpu.matmul %4, %6, %cst {dimension_numbers = #tpu.dot_dimension_numbers<[1], [0], [0], [1], [0, 0, 1, 1], [], []>} : vector<8x32xf32>, vector<32x128xf32>, vector<8x128xf32> -> vector<8x128xf32>
    %c32 = arith.constant 32 : index
    %c0_7 = arith.constant 0 : index
    %8 = vector.load %arg5[%c32, %c0_7] : memref<112x128xf32, #tpu.memory_space<vmem>>, vector<32x128xf32>
    %cst_8 = arith.constant dense<0.000000e+00> : vector<8x128xf32>
    %9 = tpu.matmul %5, %8, %cst_8 {dimension_numbers = #tpu.dot_dimension_numbers<[1], [0], [0], [1], [0, 0, 1, 1], [], []>} : vector<8x32xf32>, vector<32x128xf32>, vector<8x128xf32> -> vector<8x128xf32>
    %10 = arith.addf %7, %9 : vector<8x128xf32>
    %c64 = arith.constant 64 : index
    %c0_9 = arith.constant 0 : index
    %11 = vector.load %arg5[%c64, %c0_9] : memref<112x128xf32, #tpu.memory_space<vmem>>, vector<1x128xf32>
    %12 = vector.broadcast %11 : vector<1x128xf32> to vector<8x128xf32>
    %13 = arith.addf %10, %12 : vector<8x128xf32>
    %cst_10 = arith.constant dense<0xFF800000> : vector<8xf32>
    %14 = vector.multi_reduction <maximumf>, %13, %cst_10 [1] : vector<8x128xf32> to vector<8xf32>
    %15 = vector.shape_cast %14 : vector<8xf32> to vector<8x1xf32>
    %16 = vector.broadcast %15 : vector<8x1xf32> to vector<8x128xf32>
    %17 = arith.subf %13, %16 : vector<8x128xf32>
    %18 = math.exp %17 : vector<8x128xf32>
    %cst_11 = arith.constant dense<0.000000e+00> : vector<8xf32>
    %19 = vector.multi_reduction <add>, %18, %cst_11 [1] : vector<8x128xf32> to vector<8xf32>
    %20 = vector.shape_cast %19 : vector<8xf32> to vector<8x1xf32>
    %21 = vector.broadcast %20 : vector<8x1xf32> to vector<8x128xf32>
    %22 = arith.divf %18, %21 : vector<8x128xf32>
    %23 = vector.shape_cast %22 : vector<8x128xf32> to vector<1x8x128xf32>
    %c0_12 = arith.constant 0 : index
    %c0_13 = arith.constant 0 : index
    %c0_14 = arith.constant 0 : index
    %24 = vector.load %arg8[%c0_12, %c0_13, %c0_14] : memref<1x8x128xf32, #tpu.memory_space<vmem>>, vector<1x8x128xf32>
    tpu.vector_store %arg8[%c0_12, %c0_13, %c0_14], %23 {strides = array<i32>} : memref<1x8x128xf32, #tpu.memory_space<vmem>>, vector<1x8x128xf32>,
    %c0_15 = arith.constant 0 : index
    %c0_16 = arith.constant 0 : index
    %25 = vector.load %arg4[%c0_15, %c0_16] : memref<128x32xf32, #tpu.memory_space<vmem>>, vector<128x32xf32>
    %cst_17 = arith.constant dense<0.000000e+00> : vector<8x32xf32>
    %26 = tpu.matmul %22, %25, %cst_17 {dimension_numbers = #tpu.dot_dimension_numbers<[1], [0], [0], [1], [0, 0, 1, 1], [], []>} : vector<8x128xf32>, vector<128x32xf32>, vector<8x32xf32> -> vector<8x32xf32>
    %c0_18 = arith.constant 0 : index
    %c0_19 = arith.constant 0 : index
    %27 = vector.load %arg6[%c0_18, %c0_19] : memref<264x32xf32, #tpu.memory_space<vmem>>, vector<32x32xf32>
    %cst_20 = arith.constant dense<0.000000e+00> : vector<8x32xf32>
    %28 = tpu.matmul %4, %27, %cst_20 {dimension_numbers = #tpu.dot_dimension_numbers<[1], [0], [0], [1], [0, 0, 1, 1], [], []>} : vector<8x32xf32>, vector<32x32xf32>, vector<8x32xf32> -> vector<8x32xf32>
    %c32_21 = arith.constant 32 : index
    %c0_22 = arith.constant 0 : index
    %29 = vector.load %arg6[%c32_21, %c0_22] : memref<264x32xf32, #tpu.memory_space<vmem>>, vector<32x32xf32>
    %cst_23 = arith.constant dense<0.000000e+00> : vector<8x32xf32>
    %30 = tpu.matmul %26, %29, %cst_23 {dimension_numbers = #tpu.dot_dimension_numbers<[1], [0], [0], [1], [0, 0, 1, 1], [], []>} : vector<8x32xf32>, vector<32x32xf32>, vector<8x32xf32> -> vector<8x32xf32>
    %31 = arith.addf %28, %30 : vector<8x32xf32>
    %c256 = arith.constant 256 : index
    %c0_24 = arith.constant 0 : index
    %32 = vector.load %arg6[%c256, %c0_24] : memref<264x32xf32, #tpu.memory_space<vmem>>, vector<1x32xf32>
    %33 = vector.broadcast %32 : vector<1x32xf32> to vector<8x32xf32>
    %34 = arith.addf %31, %33 : vector<8x32xf32>
    %cst_25 = arith.constant 0.000000e+00 : f32
    %35 = vector.broadcast %cst_25 : f32 to vector<8x32xf32>
    %36 = arith.maximumf %34, %35 : vector<8x32xf32>
    %c64_26 = arith.constant 64 : index
    %c0_27 = arith.constant 0 : index
    %37 = vector.load %arg6[%c64_26, %c0_27] : memref<264x32xf32, #tpu.memory_space<vmem>>, vector<32x32xf32>
    %cst_28 = arith.constant dense<0.000000e+00> : vector<8x32xf32>
    %38 = tpu.matmul %36, %37, %cst_28 {dimension_numbers = #tpu.dot_dimension_numbers<[1], [0], [0], [1], [0, 0, 1, 1], [], []>} : vector<8x32xf32>, vector<32x32xf32>, vector<8x32xf32> -> vector<8x32xf32>
    %c257 = arith.constant 257 : index
    %c0_29 = arith.constant 0 : index
    %39 = vector.load %arg6[%c257, %c0_29] : memref<264x32xf32, #tpu.memory_space<vmem>>, vector<1x32xf32>
    %40 = vector.broadcast %39 : vector<1x32xf32> to vector<8x32xf32>
    %41 = arith.addf %38, %40 : vector<8x32xf32>
    %c96 = arith.constant 96 : index
    %c0_30 = arith.constant 0 : index
    %42 = vector.load %arg6[%c96, %c0_30] : memref<264x32xf32, #tpu.memory_space<vmem>>, vector<32x32xf32>
    %cst_31 = arith.constant dense<0.000000e+00> : vector<8x32xf32>
    %43 = tpu.matmul %36, %42, %cst_31 {dimension_numbers = #tpu.dot_dimension_numbers<[1], [0], [0], [1], [0, 0, 1, 1], [], []>} : vector<8x32xf32>, vector<32x32xf32>, vector<8x32xf32> -> vector<8x32xf32>
    %c258 = arith.constant 258 : index
    %c0_32 = arith.constant 0 : index
    %44 = vector.load %arg6[%c258, %c0_32] : memref<264x32xf32, #tpu.memory_space<vmem>>, vector<1x32xf32>
    %45 = vector.broadcast %44 : vector<1x32xf32> to vector<8x32xf32>
    %46 = arith.addf %43, %45 : vector<8x32xf32>
    %c128 = arith.constant 128 : index
    %c0_33 = arith.constant 0 : index
    %47 = vector.load %arg6[%c128, %c0_33] : memref<264x32xf32, #tpu.memory_space<vmem>>, vector<32x32xf32>
    %cst_34 = arith.constant dense<0.000000e+00> : vector<8x32xf32>
    %48 = tpu.matmul %36, %47, %cst_34 {dimension_numbers = #tpu.dot_dimension_numbers<[1], [0], [0], [1], [0, 0, 1, 1], [], []>} : vector<8x32xf32>, vector<32x32xf32>, vector<8x32xf32> -> vector<8x32xf32>
    %c259 = arith.constant 259 : index
    %c0_35 = arith.constant 0 : index
    %49 = vector.load %arg6[%c259, %c0_35] : memref<264x32xf32, #tpu.memory_space<vmem>>, vector<1x32xf32>
    %50 = vector.broadcast %49 : vector<1x32xf32> to vector<8x32xf32>
    %51 = arith.addf %48, %50 : vector<8x32xf32>
    %c160 = arith.constant 160 : index
    %c0_36 = arith.constant 0 : index
    %52 = vector.load %arg6[%c160, %c0_36] : memref<264x32xf32, #tpu.memory_space<vmem>>, vector<32x32xf32>
    %cst_37 = arith.constant dense<0.000000e+00> : vector<8x32xf32>
    %53 = tpu.matmul %5, %52, %cst_37 {dimension_numbers = #tpu.dot_dimension_numbers<[1], [0], [0], [1], [0, 0, 1, 1], [], []>} : vector<8x32xf32>, vector<32x32xf32>, vector<8x32xf32> -> vector<8x32xf32>
    %c260 = arith.constant 260 : index
    %c0_38 = arith.constant 0 : index
    %54 = vector.load %arg6[%c260, %c0_38] : memref<264x32xf32, #tpu.memory_space<vmem>>, vector<1x32xf32>
    %55 = vector.broadcast %54 : vector<1x32xf32> to vector<8x32xf32>
    %56 = arith.addf %53, %55 : vector<8x32xf32>
    %c192 = arith.constant 192 : index
    %c0_39 = arith.constant 0 : index
    %57 = vector.load %arg6[%c192, %c0_39] : memref<264x32xf32, #tpu.memory_space<vmem>>, vector<32x32xf32>
    %cst_40 = arith.constant dense<0.000000e+00> : vector<8x32xf32>
    %58 = tpu.matmul %5, %57, %cst_40 {dimension_numbers = #tpu.dot_dimension_numbers<[1], [0], [0], [1], [0, 0, 1, 1], [], []>} : vector<8x32xf32>, vector<32x32xf32>, vector<8x32xf32> -> vector<8x32xf32>
    %c261 = arith.constant 261 : index
    %c0_41 = arith.constant 0 : index
    %59 = vector.load %arg6[%c261, %c0_41] : memref<264x32xf32, #tpu.memory_space<vmem>>, vector<1x32xf32>
    %60 = vector.broadcast %59 : vector<1x32xf32> to vector<8x32xf32>
    %61 = arith.addf %58, %60 : vector<8x32xf32>
    %c224 = arith.constant 224 : index
    %c0_42 = arith.constant 0 : index
    %62 = vector.load %arg6[%c224, %c0_42] : memref<264x32xf32, #tpu.memory_space<vmem>>, vector<32x32xf32>
    %cst_43 = arith.constant dense<0.000000e+00> : vector<8x32xf32>
    %63 = tpu.matmul %5, %62, %cst_43 {dimension_numbers = #tpu.dot_dimension_numbers<[1], [0], [0], [1], [0, 0, 1, 1], [], []>} : vector<8x32xf32>, vector<32x32xf32>, vector<8x32xf32> -> vector<8x32xf32>
    %c262 = arith.constant 262 : index
    %c0_44 = arith.constant 0 : index
    %64 = vector.load %arg6[%c262, %c0_44] : memref<264x32xf32, #tpu.memory_space<vmem>>, vector<1x32xf32>
    %65 = vector.broadcast %64 : vector<1x32xf32> to vector<8x32xf32>
    %66 = arith.addf %63, %65 : vector<8x32xf32>
    %67 = arith.addf %41, %56 : vector<8x32xf32>
    %68 = arith.negf %67 : vector<8x32xf32>
    %69 = math.exp %68 : vector<8x32xf32>
    %cst_45 = arith.constant 1.000000e+00 : f32
    %70 = vector.broadcast %cst_45 : f32 to vector<8x32xf32>
    %71 = arith.addf %70, %69 : vector<8x32xf32>
    %72 = arith.divf %70, %71 : vector<8x32xf32>
    %73 = arith.addf %46, %61 : vector<8x32xf32>
    %74 = arith.negf %73 : vector<8x32xf32>
    %75 = math.exp %74 : vector<8x32xf32>
    %cst_46 = arith.constant 1.000000e+00 : f32
    %76 = vector.broadcast %cst_46 : f32 to vector<8x32xf32>
    %77 = arith.addf %76, %75 : vector<8x32xf32>
    %78 = arith.divf %76, %77 : vector<8x32xf32>
    %79 = arith.mulf %72, %66 : vector<8x32xf32>
    %80 = arith.addf %51, %79 : vector<8x32xf32>
    %81 = math.tanh %80 : vector<8x32xf32>
    %cst_47 = arith.constant 1.000000e+00 : f32
    %82 = vector.broadcast %cst_47 : f32 to vector<8x32xf32>
    %83 = arith.subf %82, %78 : vector<8x32xf32>
    %84 = arith.mulf %83, %81 : vector<8x32xf32>
    %85 = arith.mulf %78, %5 : vector<8x32xf32>
    %86 = arith.addf %84, %85 : vector<8x32xf32>
    %c0_48 = arith.constant 0 : index
    %c0_49 = arith.constant 0 : index
    %87 = vector.load %arg10[%c0_48, %c0_49] : memref<8x32xf32, #tpu.memory_space<vmem>>, vector<8x32xf32>
    tpu.vector_store %arg10[%c0_48, %c0_49], %86 {strides = array<i32>} : memref<8x32xf32, #tpu.memory_space<vmem>>, vector<8x32xf32>,
    %c0_50 = arith.constant 0 : index
    %c0_51 = arith.constant 0 : index
    %88 = vector.load %arg9[%c0_50, %c0_51] : memref<8x32xf32, #tpu.memory_space<vmem>>, vector<8x32xf32>
    tpu.vector_store %arg9[%c0_50, %c0_51], %86 {strides = array<i32>} : memref<8x32xf32, #tpu.memory_space<vmem>>, vector<8x32xf32>,
    %c72 = arith.constant 72 : index
    %c0_52 = arith.constant 0 : index
    %89 = vector.load %arg5[%c72, %c0_52] : memref<112x128xf32, #tpu.memory_space<vmem>>, vector<32x128xf32>
    %cst_53 = arith.constant dense<0.000000e+00> : vector<8x128xf32>
    %90 = tpu.matmul %86, %89, %cst_53 {dimension_numbers = #tpu.dot_dimension_numbers<[1], [0], [0], [1], [0, 0, 1, 1], [], []>} : vector<8x32xf32>, vector<32x128xf32>, vector<8x128xf32> -> vector<8x128xf32>
    %c104 = arith.constant 104 : index
    %c0_54 = arith.constant 0 : index
    %91 = vector.load %arg5[%c104, %c0_54] : memref<112x128xf32, #tpu.memory_space<vmem>>, vector<1x128xf32>
    %92 = vector.broadcast %91 : vector<1x128xf32> to vector<8x128xf32>
    %93 = arith.addf %90, %92 : vector<8x128xf32>
    %cst_55 = arith.constant dense<0xFF800000> : vector<8xf32>
    %94 = vector.multi_reduction <maximumf>, %93, %cst_55 [1] : vector<8x128xf32> to vector<8xf32>
    %95 = vector.shape_cast %94 : vector<8xf32> to vector<8x1xf32>
    %96 = vector.broadcast %95 : vector<8x1xf32> to vector<8x128xf32>
    %97 = arith.subf %93, %96 : vector<8x128xf32>
    %98 = math.exp %97 : vector<8x128xf32>
    %cst_56 = arith.constant dense<0.000000e+00> : vector<8xf32>
    %99 = vector.multi_reduction <add>, %98, %cst_56 [1] : vector<8x128xf32> to vector<8xf32>
    %100 = vector.shape_cast %99 : vector<8xf32> to vector<8x1xf32>
    %101 = math.log %100 : vector<8x1xf32>
    %102 = vector.broadcast %101 : vector<8x1xf32> to vector<8x128xf32>
    %103 = arith.subf %97, %102 : vector<8x128xf32>
    %104 = vector.shape_cast %103 : vector<8x128xf32> to vector<1x8x128xf32>
    %c0_57 = arith.constant 0 : index
    %c0_58 = arith.constant 0 : index
    %c0_59 = arith.constant 0 : index
    %105 = vector.load %arg7[%c0_57, %c0_58, %c0_59] : memref<1x8x128xf32, #tpu.memory_space<vmem>>, vector<1x8x128xf32>
    tpu.vector_store %arg7[%c0_57, %c0_58, %c0_59], %104 {strides = array<i32>} : memref<1x8x128xf32, #tpu.memory_space<vmem>>, vector<1x8x128xf32>,
    return
  }
  func.func @transform_0(%arg0: i32, %arg1: i32) -> (i32, i32, i32) {
    %c0_i32 = arith.constant 0 : i32
    %c0_i32_0 = arith.constant 0 : i32
    return %arg1, %arg0, %c0_i32 : i32, i32, i32
  }
  func.func @transform_1(%arg0: i32, %arg1: i32) -> (i32, i32) {
    %c0_i32 = arith.constant 0 : i32
    %c0_i32_0 = arith.constant 0 : i32
    return %arg0, %c0_i32 : i32, i32
  }
  func.func @transform_2(%arg0: i32, %arg1: i32) -> (i32, i32) {
    %c0_i32 = arith.constant 0 : i32
    %c0_i32_0 = arith.constant 0 : i32
    %c0_i32_1 = arith.constant 0 : i32
    return %c0_i32, %c0_i32_0 : i32, i32
  }
  func.func @transform_3(%arg0: i32, %arg1: i32) -> (i32, i32) {
    %c0_i32 = arith.constant 0 : i32
    %c0_i32_0 = arith.constant 0 : i32
    %c0_i32_1 = arith.constant 0 : i32
    return %c0_i32, %c0_i32_0 : i32, i32
  }
  func.func @transform_4(%arg0: i32, %arg1: i32) -> (i32, i32) {
    %c0_i32 = arith.constant 0 : i32
    %c0_i32_0 = arith.constant 0 : i32
    %c0_i32_1 = arith.constant 0 : i32
    return %c0_i32, %c0_i32_0 : i32, i32
  }
  func.func @transform_5(%arg0: i32, %arg1: i32) -> (i32, i32, i32) {
    %c0_i32 = arith.constant 0 : i32
    %c0_i32_0 = arith.constant 0 : i32
    return %arg1, %arg0, %c0_i32 : i32, i32, i32
  }
  func.func @transform_6(%arg0: i32, %arg1: i32) -> (i32, i32, i32) {
    %c0_i32 = arith.constant 0 : i32
    %c0_i32_0 = arith.constant 0 : i32
    return %arg1, %arg0, %c0_i32 : i32, i32, i32
  }
  func.func @transform_7(%arg0: i32, %arg1: i32) -> (i32, i32) {
    %c0_i32 = arith.constant 0 : i32
    %c0_i32_0 = arith.constant 0 : i32
    return %arg0, %c0_i32 : i32, i32
  }
}

</mosaic_0001>

<llo_original>
// kernel: tpu_custom_call.1
$region0: #{tpu_custom_call.1}
  #allocation0 [shape = 'u32[]', space=smem, size = 0x4, offset = 0x4, fixed_abs, tag = 'smem constant byte address 0x4 - core index']
  #allocation1 [shape = 'u32[144,128]{1,0:T(1,128)}', space=vmem, size = 0x12000, scoped, tag = 'internal scratch']
  #allocation2 [shape = 'f32[8,32]{1,0:T(8,128)}', space=vmem, size = 0x1000, scoped, tag = 'scratch operand']
  %s0 = inlined_call_operand.vmem [shape: f32[6,16,32], index: 0, kind: input, shape index: {}]
  %s1 = inlined_call_operand.vmem [shape: f32[16,32], index: 1, kind: input, shape index: {}]
  %s2 = inlined_call_operand.vmem [shape: f32[128,32], index: 2, kind: input, shape index: {}]
  %s3 = inlined_call_operand.vmem [shape: f32[112,128], index: 3, kind: input, shape index: {}]
  %s4 = inlined_call_operand.vmem [shape: f32[264,32], index: 4, kind: input, shape index: {}]
  %s5 = inlined_call_operand.hbm [shape: f32[6,16,128], index: 5, kind: output, shape index: {0}]
  %s6 = inlined_call_operand.hbm [shape: f32[6,16,128], index: 6, kind: output, shape index: {1}]
  %s7 = inlined_call_operand.hbm [shape: f32[16,32], index: 7, kind: output, shape index: {2}]
  %8 = xla_tuple %s5, %s6, %s7
  %s9 = sld [smem:[#allocation0]]
  $region73: #{tpu_custom_call.1} parent=0
    _
  %s11 = ssub.s32 1, %s9
  %s12 = scalar_select 0, %s11, %s9
  $region1: #{tpu_custom_call.1} parent=0
    #allocation3 [shape = 'u8[8192]{0}', space=vmem, size = 0x2000, scoped, tag = 'output window, operand 0']
    #allocation4 [shape = 's32[2]{0}', space=sflag, size = 0x8, scoped, tag = 'scoped memory for tpu_custom_call.1']
    #allocation5 [shape = 'u8[8192]{0}', space=vmem, size = 0x2000, scoped, tag = 'output window, operand 1']
    #allocation6 [shape = 's32[2]{0}', space=sflag, size = 0x8, scoped, tag = 'scoped memory for tpu_custom_call.1']
    #allocation7 [shape = 'u8[8192]{0}', space=vmem, size = 0x2000, scoped, tag = 'output window, operand 2']
    %13 = vsyncpa [#allocation4], 0
    %s14 = scalar_lea.sflag [#allocation4], 1
    %15 = vsyncpa %s14, 0
    %16 = vsyncpa [#allocation6], 0
    %s17 = scalar_lea.sflag [#allocation6], 1
    %18 = vsyncpa %s17, 0
    loop: start=0, step=1, limit=14
    $region2: #{tpu_custom_call.1} parent=1 // loop_pre_header
      _
    $region3: #{tpu_custom_call.1} parent=1 // loop_header
      %s20 = sphi 0, %s24
      %p21 = scmp.ge.s32.totalorder %s20, 14
      %s27 = sphi 0, %s39
      %s28 = sphi 0, %s35
      %s29 = sphi 0, %s27
      %s30 = sphi 0, %s28
      %s31 = sphi 0, %s29
      %s32 = sphi 0, %s30
      %s44 = sphi 0, %s46
      %s47 = sphi 0, %s44
      %s48 = sphi 0, %s47
      %s64 = sphi 0, %s48
      %s70 = sphi 0, %s72
      %s73 = sphi 0, %s70
      %s74 = sphi 0, %s73
      %s90 = sphi 0, %s74
      %s94 = sphi 0, %s94
      %s96 = sphi 0, %s94
      %s97 = sphi 0, %s96
      %s111 = sphi 0, %s97
      %s115 = sphi 0, %s115
      %s117 = sphi 0, %s115
      %s118 = sphi 0, %s117
      %s132 = sphi 0, %s118
      %s136 = sphi 0, %s136
      %s138 = sphi 0, %s136
      %s139 = sphi 0, %s138
      %s153 = sphi 0, %s139
      %s161 = sphi 0, %s163
      %s164 = sphi 0, %s161
      %s165 = sphi 0, %s164
      %s181 = sphi 0, %s165
      %s189 = sphi 0, %s191
      %s192 = sphi 0, %s189
      %s193 = sphi 0, %s192
      %s209 = sphi 0, %s193
      %s215 = sphi 0, %s217
      %s218 = sphi 0, %s215
      %s219 = sphi 0, %s218
      %s235 = sphi 0, %s219
    $region4: #{tpu_custom_call.1} parent=1 // loop_header_branch
      %23 = sbr.rel (%p21) target = $region8
    $region5: #{tpu_custom_call.1} parent=1 // loop_body
      %s25 = ssub.s32 %s20, 1
      %s26 = ssub.s32 %s20, 2
      %s33 = sadd.s32 1, %s28
      %p34 = scmp.ge.s32.totalorder %s33, 6
      %s35 = scalar_select %p34, 0, %s33
      %s36 = sadd.s32 1, %s27
      %s37 = scalar_select %p34, %s36, %s27
      %p38 = scmp.ge.s32.totalorder %s37, 2
      %s39 = scalar_select %p38, 0, %s37
      %s40 = ssub.s32 %s28, %s35
      %s41 = ssub.s32 %s27, %s39
      %s42 = sor.u32 %s40, %s41
      %p43 = scmp.eq.s32.totalorder %s42, 0
      %s45 = sadd.s32 %s44, 1
      %s46 = scalar_select %p43, %s44, %s45
      %p49 = pneg %p43
      %p50 = scmp.eq.s32.totalorder %s20, 11
      %p51 = por %p49, %p50
      %p52 = scmp.ne.s32.totalorder %s44, %s47
      %p53 = scmp.eq.s32.totalorder %s20, 0
      %p54 = por %p52, %p53
      %p55 = scmp.ne.s32.totalorder %s44, %s47
      %p56 = scmp.eq.s32.totalorder %s25, 11
      %p57 = por %p55, %p56
      %p58 = scmp.ne.s32.totalorder %s47, %s48
      %p59 = scmp.eq.s32.totalorder %s25, 0
      %p60 = por %p58, %p59
      %p61 = scmp.ne.s32.totalorder %s47, %s48
      %p62 = scmp.eq.s32.totalorder %s26, 11
      %p63 = por %p61, %p62
      %p65 = scmp.ne.s32.totalorder %s48, %s64
      %p66 = scmp.eq.s32.totalorder %s26, 0
      %p67 = por %p65, %p66
      %s68 = ssub.s32 %s27, %s39
      %p69 = scmp.eq.s32.totalorder %s68, 0
      %s71 = sadd.s32 %s70, 1
      %s72 = scalar_select %p69, %s70, %s71
      %p75 = pneg %p69
      %p76 = scmp.eq.s32.totalorder %s20, 11
      %p77 = por %p75, %p76
      %p78 = scmp.ne.s32.totalorder %s70, %s73
      %p79 = scmp.eq.s32.totalorder %s20, 0
      %p80 = por %p78, %p79
      %p81 = scmp.ne.s32.totalorder %s70, %s73
      %p82 = scmp.eq.s32.totalorder %s25, 11
      %p83 = por %p81, %p82
      %p84 = scmp.ne.s32.totalorder %s73, %s74
      %p85 = scmp.eq.s32.totalorder %s25, 0
      %p86 = por %p84, %p85
      %p87 = scmp.ne.s32.totalorder %s73, %s74
      %p88 = scmp.eq.s32.totalorder %s26, 11
      %p89 = por %p87, %p88
      %p91 = scmp.ne.s32.totalorder %s74, %s90
      %p92 = scmp.eq.s32.totalorder %s26, 0
      %p93 = por %p91, %p92
      %s95 = sadd.s32 %s94, 1
      %p98 = scmp.eq.s32.totalorder %s20, 11
      %p99 = scmp.ne.s32.totalorder %s94, %s96
      %p100 = scmp.eq.s32.totalorder %s20, 0
      %p101 = por %p99, %p100
      %p102 = scmp.ne.s32.totalorder %s94, %s96
      %p103 = scmp.eq.s32.totalorder %s25, 11
      %p104 = por %p102, %p103
      %p105 = scmp.ne.s32.totalorder %s96, %s97
      %p106 = scmp.eq.s32.totalorder %s25, 0
      %p107 = por %p105, %p106
      %p108 = scmp.ne.s32.totalorder %s96, %s97
      %p109 = scmp.eq.s32.totalorder %s26, 11
      %p110 = por %p108, %p109
      %p112 = scmp.ne.s32.totalorder %s97, %s111
      %p113 = scmp.eq.s32.totalorder %s26, 0
      %p114 = por %p112, %p113
      %s116 = sadd.s32 %s115, 1
      %p119 = scmp.eq.s32.totalorder %s20, 11
      %p120 = scmp.ne.s32.totalorder %s115, %s117
      %p121 = scmp.eq.s32.totalorder %s20, 0
      %p122 = por %p120, %p121
      %p123 = scmp.ne.s32.totalorder %s115, %s117
      %p124 = scmp.eq.s32.totalorder %s25, 11
      %p125 = por %p123, %p124
      %p126 = scmp.ne.s32.totalorder %s117, %s118
      %p127 = scmp.eq.s32.totalorder %s25, 0
      %p128 = por %p126, %p127
      %p129 = scmp.ne.s32.totalorder %s117, %s118
      %p130 = scmp.eq.s32.totalorder %s26, 11
      %p131 = por %p129, %p130
      %p133 = scmp.ne.s32.totalorder %s118, %s132
      %p134 = scmp.eq.s32.totalorder %s26, 0
      %p135 = por %p133, %p134
      %s137 = sadd.s32 %s136, 1
      %p140 = scmp.eq.s32.totalorder %s20, 11
      %p141 = scmp.ne.s32.totalorder %s136, %s138
      %p142 = scmp.eq.s32.totalorder %s20, 0
      %p143 = por %p141, %p142
      %p144 = scmp.ne.s32.totalorder %s136, %s138
      %p145 = scmp.eq.s32.totalorder %s25, 11
      %p146 = por %p144, %p145
      %p147 = scmp.ne.s32.totalorder %s138, %s139
      %p148 = scmp.eq.s32.totalorder %s25, 0
      %p149 = por %p147, %p148
      %p150 = scmp.ne.s32.totalorder %s138, %s139
      %p151 = scmp.eq.s32.totalorder %s26, 11
      %p152 = por %p150, %p151
      %p154 = scmp.ne.s32.totalorder %s139, %s153
      %p155 = scmp.eq.s32.totalorder %s26, 0
      %p156 = por %p154, %p155
      %s157 = ssub.s32 %s28, %s35
      %s158 = ssub.s32 %s27, %s39
      %s159 = sor.u32 %s157, %s158
      %p160 = scmp.eq.s32.totalorder %s159, 0
      %s162 = sadd.s32 %s161, 1
      %s163 = scalar_select %p160, %s161, %s162
      %p166 = pneg %p160
      %p167 = scmp.eq.s32.totalorder %s20, 11
      %p168 = por %p166, %p167
      %p169 = scmp.ne.s32.totalorder %s161, %s164
      %p170 = scmp.eq.s32.totalorder %s20, 0
      %p171 = por %p169, %p170
      %p172 = scmp.ne.s32.totalorder %s161, %s164
      %p173 = scmp.eq.s32.totalorder %s25, 11
      %p174 = por %p172, %p173
      %p175 = scmp.ne.s32.totalorder %s164, %s165
      %p176 = scmp.eq.s32.totalorder %s25, 0
      %p177 = por %p175, %p176
      %p178 = scmp.ne.s32.totalorder %s164, %s165
      %p179 = scmp.eq.s32.totalorder %s26, 11
      %p180 = por %p178, %p179
      %p182 = scmp.ne.s32.totalorder %s165, %s181
      %p183 = scmp.eq.s32.totalorder %s26, 0
      %p184 = por %p182, %p183
      %s185 = ssub.s32 %s28, %s35
      %s186 = ssub.s32 %s27, %s39
      %s187 = sor.u32 %s185, %s186
      %p188 = scmp.eq.s32.totalorder %s187, 0
      %s190 = sadd.s32 %s189, 1
      %s191 = scalar_select %p188, %s189, %s190
      %p194 = pneg %p188
      %p195 = scmp.eq.s32.totalorder %s20, 11
      %p196 = por %p194, %p195
      %p197 = scmp.ne.s32.totalorder %s189, %s192
      %p198 = scmp.eq.s32.totalorder %s20, 0
      %p199 = por %p197, %p198
      %p200 = scmp.ne.s32.totalorder %s189, %s192
      %p201 = scmp.eq.s32.totalorder %s25, 11
      %p202 = por %p200, %p201
      %p203 = scmp.ne.s32.totalorder %s192, %s193
      %p204 = scmp.eq.s32.totalorder %s25, 0
      %p205 = por %p203, %p204
      %p206 = scmp.ne.s32.totalorder %s192, %s193
      %p207 = scmp.eq.s32.totalorder %s26, 11
      %p208 = por %p206, %p207
      %p210 = scmp.ne.s32.totalorder %s193, %s209
      %p211 = scmp.eq.s32.totalorder %s26, 0
      %p212 = por %p210, %p211
      %s213 = ssub.s32 %s27, %s39
      %p214 = scmp.eq.s32.totalorder %s213, 0
      %s216 = sadd.s32 %s215, 1
      %s217 = scalar_select %p214, %s215, %s216
      %p220 = pneg %p214
      %p221 = scmp.eq.s32.totalorder %s20, 11
      %p222 = por %p220, %p221
      %p223 = scmp.ne.s32.totalorder %s215, %s218
      %p224 = scmp.eq.s32.totalorder %s20, 0
      %p225 = por %p223, %p224
      %p226 = scmp.ne.s32.totalorder %s215, %s218
      %p227 = scmp.eq.s32.totalorder %s25, 11
      %p228 = por %p226, %p227
      %p229 = scmp.ne.s32.totalorder %s218, %s219
      %p230 = scmp.eq.s32.totalorder %s25, 0
      %p231 = por %p229, %p230
      %p232 = scmp.ne.s32.totalorder %s218, %s219
      %p233 = scmp.eq.s32.totalorder %s26, 11
      %p234 = por %p232, %p233
      %p236 = scmp.ne.s32.totalorder %s219, %s235
      %p237 = scmp.eq.s32.totalorder %s26, 0
      %p238 = por %p236, %p237
      %p239 = scmp.le.s32.totalorder 1, %s20
      %p240 = scmp.lt.s32.totalorder %s20, 13
      %p241 = pnand %p239, %p240
      %p242 = pneg %p241
      // Predicated region
      $region9: #{tpu_custom_call.1} parent=5 // pred_check
        _
      $region10: #{tpu_custom_call.1} parent=5 // pred_check_branch
        %244 = sbr.rel (%p241) target = $region12
      $region11: #{tpu_custom_call.1} parent=5 // pred_region
        %s245 = ssub.s32 %s20, 1
        // Predicated region
        $region13: #{tpu_custom_call.1} parent=11 // pred_check
          %p246 = pneg %p107
        $region14: #{tpu_custom_call.1} parent=11 // pred_check_branch
          %248 = sbr.rel (%p246) target = $region16
        $region15: #{tpu_custom_call.1} parent=11 // pred_region
          _
        $region16: #{tpu_custom_call.1} parent=11 // pred_fallthru
          _
        // Predicated region
        $region17: #{tpu_custom_call.1} parent=11 // pred_check
          %p249 = pneg %p128
        $region18: #{tpu_custom_call.1} parent=11 // pred_check_branch
          %251 = sbr.rel (%p249) target = $region20
        $region19: #{tpu_custom_call.1} parent=11 // pred_region
          _
        $region20: #{tpu_custom_call.1} parent=11 // pred_fallthru
          _
        // Predicated region
        $region21: #{tpu_custom_call.1} parent=11 // pred_check
          %p252 = pneg %p149
        $region22: #{tpu_custom_call.1} parent=11 // pred_check_branch
          %254 = sbr.rel (%p252) target = $region24
        $region23: #{tpu_custom_call.1} parent=11 // pred_region
          _
        $region24: #{tpu_custom_call.1} parent=11 // pred_fallthru
          _
      $region12: #{tpu_custom_call.1} parent=5 // pred_fallthru
        _
      %p255 = scmp.lt.s32.totalorder %s20, 12
      // Predicated region
      $region25: #{tpu_custom_call.1} parent=5 // pred_check
        %p256 = pneg %p255
      $region26: #{tpu_custom_call.1} parent=5 // pred_check_branch
        %258 = sbr.rel (%p256) target = $region28
      $region27: #{tpu_custom_call.1} parent=5 // pred_region
        // Predicated region
        $region29: #{tpu_custom_call.1} parent=27 // pred_check
          %p259 = pneg %p54
        $region30: #{tpu_custom_call.1} parent=27 // pred_check_branch
          %261 = sbr.rel (%p259) target = $region32
        $region31: #{tpu_custom_call.1} parent=27 // pred_region
          %p262 = scmp.lt.s32.totalorder %s28, 5
          %s263 = scalar_select %p262, %s28, 5
          %p264 = scmp.lt.s32.totalorder %s27, 1
          %s265 = scalar_select %p264, %s27, 1
          %s266 = smul.addr %s263, 2
          %s267 = sadd.s32 %s265, %s266
          %s268 = smul.addr %s267, 8
          %s269 = scalar_lea.vmem %s0, %s268
        $region32: #{tpu_custom_call.1} parent=27 // pred_fallthru
          _
        // Predicated region
        $region33: #{tpu_custom_call.1} parent=27 // pred_check
          %p270 = pneg %p80
        $region34: #{tpu_custom_call.1} parent=27 // pred_check_branch
          %272 = sbr.rel (%p270) target = $region36
        $region35: #{tpu_custom_call.1} parent=27 // pred_region
          %p273 = scmp.lt.s32.totalorder %s27, 1
          %s274 = scalar_select %p273, %s27, 1
          %s275 = smul.addr %s274, 8
          %s276 = scalar_lea.vmem %s1, %s275
        $region36: #{tpu_custom_call.1} parent=27 // pred_fallthru
          _
      $region28: #{tpu_custom_call.1} parent=5 // pred_fallthru
        _
      %p277 = scmp.le.s32.totalorder 1, %s20
      %p278 = scmp.lt.s32.totalorder %s20, 13
      %p279 = pnand %p277, %p278
      %p280 = pneg %p279
      // Predicated region
      $region37: #{tpu_custom_call.1} parent=5 // pred_check
        _
      $region38: #{tpu_custom_call.1} parent=5 // pred_check_branch
        %282 = sbr.rel (%p279) target = $region40
      $region39: #{tpu_custom_call.1} parent=5 // pred_region
        %s283 = ssub.s32 %s20, 1
        %p284 = scmp.lt.s32.totalorder %s30, 5
        %s285 = scalar_select %p284, %s30, 5
        %p286 = scmp.lt.s32.totalorder %s29, 1
        %s287 = scalar_select %p286, %s29, 1
        %s288 = smul.addr %s285, 2
        %s289 = sadd.s32 %s287, %s288
        %s290 = smul.addr %s289, 8
        %s291 = scalar_lea.vmem %s0, %s290
        %p292 = pneg %p60
        %p293 = pneg %p57
        %p294 = scmp.lt.s32.totalorder %s29, 1
        %s295 = scalar_select %p294, %s29, 1
        %s296 = smul.addr %s295, 8
        %s297 = scalar_lea.vmem %s1, %s296
        %p298 = pneg %p86
        %p299 = pneg %p83
        %p300 = pneg %p107
        %p301 = pneg %p104
        %p302 = pneg %p128
        %p303 = pneg %p125
        %p304 = pneg %p149
        %p305 = pneg %p146
        %p306 = pneg %p177
        %p307 = pneg %p174
        %s308 = sand.u32 %s164, 1
        %s309 = scalar_lea.sflag [#allocation4], %s308
        %s310 = sand.u32 %s164, 1
        %s311 = smul.addr %s310, 8
        %s312 = scalar_lea.vmem [#allocation3], %s311
        %p313 = pneg %p205
        %p314 = pneg %p202
        %s315 = sand.u32 %s25, 1
        %s316 = scalar_lea.sflag [#allocation6], %s315
        %s317 = sand.u32 %s192, 1
        %s318 = smul.addr %s317, 8
        %s319 = scalar_lea.vmem [#allocation5], %s318
        %p320 = pneg %p231
        %p321 = pneg %p228
        %s322 = sand.u32 %s25, 1
        %s323 = scalar_lea.sflag [#allocation6], %s322
        %s324 = sand.u32 %s218, 1
        %s325 = smul.addr %s324, 8
        %s326 = scalar_lea.vmem [#allocation7], %s325
        %p327 = scmp.lt.s32.totalorder %s30, 5
        %s328 = scalar_select %p327, %s30, 5
        %p329 = scmp.lt.s32.totalorder %s29, 1
        %s330 = scalar_select %p329, %s29, 1
        %s331 = smul.addr %s328, 2
        %s332 = sadd.s32 %s330, %s331
        %s333 = smul.addr %s332, 8
        %s334 = scalar_lea.vmem %s0, %s333
        %p335 = scmp.lt.s32.totalorder %s29, 1
        %s336 = scalar_select %p335, %s29, 1
        %s337 = smul.addr %s336, 8
        %s338 = scalar_lea.vmem %s1, %s337
        %p339 = scmp.eq.s32.totalorder %s30, 0
        // Predicated region
        $region41: #{tpu_custom_call.1} parent=39 // pred_check
          %p340 = pneg %p339
        $region42: #{tpu_custom_call.1} parent=39 // pred_check_branch
          %342 = sbr.rel (%p340) target = $region44
        $region43: #{tpu_custom_call.1} parent=39 // pred_region
          %v343 = vld [vmem:[%s338] sm:$0xff]
          %vm344 = vcmask 261120
          %345 = vst.msk [vmem:[#allocation2] sm:$0xff] %vm344, %v343
        $region44: #{tpu_custom_call.1} parent=39 // pred_fallthru
          _
        %v346 = vld [vmem:[%s334] sm:$0xff]
        %v347 = vld [vmem:[#allocation2] sm:$0xff]
        %v348 = vld [vmem:[%s3] sm:$0xff]
        %v349 = vld [vmem:[%s3 + $0x8] sm:$0xff]
        %v350 = vld [vmem:[%s3 + $0x10] sm:$0xff]
        %v351 = vld [vmem:[%s3 + $0x18] sm:$0xff]
        %v352 = vld [vmem:[%s3 + $0x20] sm:$0xff]
        %v353 = vld [vmem:[%s3 + $0x28] sm:$0xff]
        %v354 = vld [vmem:[%s3 + $0x30] sm:$0xff]
        %v355 = vld [vmem:[%s3 + $0x38] sm:$0xff]
        %vm356 = vcmask 261120
        %v358 = vsel %vm356, %v347, 0
        %360 = vmatprep.subr.mxu0 0.0
        %361 = vmatpush1.msra.mxu0 %v352
        %362 = vmatprep.subr.mxu0 0.0
        %363 = vmatpush1.msra.mxu0 %v353
        %364 = vmatprep.subr.mxu0 0.0
        %365 = vmatpush1.msra.mxu0 %v354
        %366 = vmatprep.subr.mxu0 0.0
        %367 = vmatpush1.msra.mxu0 %v355
        %368 = vmatprep.subr.mxu0 0.0
        %369 = vmatpush1.msra.mxu0 0.0
        %370 = vmatprep.subr.mxu0 0.0
        %371 = vmatpush1.msra.mxu0 0.0
        %372 = vmatprep.subr.mxu0 0.0
        %373 = vmatpush1.msra.mxu0 0.0
        %374 = vmatprep.subr.mxu0 0.0
        %375 = vmatpush1.msra.mxu0 0.0
        %376 = vmatprep.subr.mxu0 0.0
        %377 = vmatpush1.msra.mxu0 0.0
        %378 = vmatprep.subr.mxu0 0.0
        %379 = vmatpush1.msra.mxu0 0.0
        %380 = vmatprep.subr.mxu0 0.0
        %381 = vmatpush1.msra.mxu0 0.0
        %382 = vmatprep.subr.mxu0 0.0
        %383 = vmatpush1.msra.mxu0 0.0
        %384 = vmatprep.subr.mxu0 0.0
        %385 = vmatpush1.msra.mxu0 0.0
        %386 = vmatprep.subr.mxu0 0.0
        %387 = vmatpush1.msra.mxu0 0.0
        %388 = vmatprep.subr.mxu0 0.0
        %389 = vmatpush1.msra.mxu0 0.0
        %390 = vmatprep.subr.mxu0 0.0
        %391 = vmatpush1.msra.mxu0 0.0
        %392 = vmatprep.subr.mxu0 0.0
        %393 = vmatpush1.msra.mxu0 0.0
        %394 = vmatprep.subr.mxu0 0.0
        %395 = vmatpush1.msra.mxu0 0.0
        %396 = vmatprep.subr.mxu0 0.0
        %397 = vmatpush1.msra.mxu0 0.0
        %398 = vmatprep.subr.mxu0 0.0
        %399 = vmatpush1.msra.mxu0 0.0
        %400 = vmatprep.subr.mxu0 0.0
        %401 = vmatpush1.msra.mxu0 0.0
        %402 = vmatprep.subr.mxu0 0.0
        %403 = vmatpush1.msra.mxu0 0.0
        %404 = vmatprep.subr.mxu0 0.0
        %405 = vmatpush1.msra.mxu0 0.0
        %406 = vmatprep.subr.mxu0 0.0
        %407 = vmatpush1.msra.mxu0 0.0
        %408 = vmatprep.subr.mxu0 0.0
        %409 = vmatpush1.msra.mxu0 0.0
        %410 = vmatprep.subr.mxu0 0.0
        %411 = vmatpush1.msra.mxu0 0.0
        %412 = vmatprep.subr.mxu0 0.0
        %413 = vmatpush1.msra.mxu0 0.0
        %414 = vmatprep.subr.mxu0 0.0
        %415 = vmatpush1.msra.mxu0 0.0
        %416 = vmatprep.subr.mxu0 0.0
        %417 = vmatpush1.msra.mxu0 0.0
        %418 = vmatprep.subr.mxu0 0.0
        %419 = vmatpush1.msra.mxu0 0.0
        %420 = vmatprep.subr.mxu0 0.0
        %421 = vmatpush1.msra.mxu0 0.0
        %422 = vmatprep.subr.mxu0 0.0
        %423 = vmatpush1.msra.mxu0 0.0
        %424 = vmatprep.mubr.f32.mxu0 0.0
        %425 = vmatmul.mubr.f32.gmra.mrb[0].mxu0 %v358
        %v426 = vpop.f32.mrb[0].mxu0
        %v427 = vadd.f32 0.0, %v426
        %v428 = vpop.f32.mrb[0].mxu0
        %429 = vdwg.mxu0
        %v431 = vsel %vm356, %v346, 0
        %433 = vmatprep.subr.mxu0 0.0
        %434 = vmatpush1.msra.mxu0 %v348
        %435 = vmatprep.subr.mxu0 0.0
        %436 = vmatpush1.msra.mxu0 %v349
        %437 = vmatprep.subr.mxu0 0.0
        %438 = vmatpush1.msra.mxu0 %v350
        %439 = vmatprep.subr.mxu0 0.0
        %440 = vmatpush1.msra.mxu0 %v351
        %441 = vmatprep.subr.mxu0 0.0
        %442 = vmatpush1.msra.mxu0 0.0
        %443 = vmatprep.subr.mxu0 0.0
        %444 = vmatpush1.msra.mxu0 0.0
        %445 = vmatprep.subr.mxu0 0.0
        %446 = vmatpush1.msra.mxu0 0.0
        %447 = vmatprep.subr.mxu0 0.0
        %448 = vmatpush1.msra.mxu0 0.0
        %449 = vmatprep.subr.mxu0 0.0
        %450 = vmatpush1.msra.mxu0 0.0
        %451 = vmatprep.subr.mxu0 0.0
        %452 = vmatpush1.msra.mxu0 0.0
        %453 = vmatprep.subr.mxu0 0.0
        %454 = vmatpush1.msra.mxu0 0.0
        %455 = vmatprep.subr.mxu0 0.0
        %456 = vmatpush1.msra.mxu0 0.0
        %457 = vmatprep.subr.mxu0 0.0
        %458 = vmatpush1.msra.mxu0 0.0
        %459 = vmatprep.subr.mxu0 0.0
        %460 = vmatpush1.msra.mxu0 0.0
        %461 = vmatprep.subr.mxu0 0.0
        %462 = vmatpush1.msra.mxu0 0.0
        %463 = vmatprep.subr.mxu0 0.0
        %464 = vmatpush1.msra.mxu0 0.0
        %465 = vmatprep.subr.mxu0 0.0
        %466 = vmatpush1.msra.mxu0 0.0
        %467 = vmatprep.subr.mxu0 0.0
        %468 = vmatpush1.msra.mxu0 0.0
        %469 = vmatprep.subr.mxu0 0.0
        %470 = vmatpush1.msra.mxu0 0.0
        %471 = vmatprep.subr.mxu0 0.0
        %472 = vmatpush1.msra.mxu0 0.0
        %473 = vmatprep.subr.mxu0 0.0
        %474 = vmatpush1.msra.mxu0 0.0
        %475 = vmatprep.subr.mxu0 0.0
        %476 = vmatpush1.msra.mxu0 0.0
        %477 = vmatprep.subr.mxu0 0.0
        %478 = vmatpush1.msra.mxu0 0.0
        %479 = vmatprep.subr.mxu0 0.0
        %480 = vmatpush1.msra.mxu0 0.0
        %481 = vmatprep.subr.mxu0 0.0
        %482 = vmatpush1.msra.mxu0 0.0
        %483 = vmatprep.subr.mxu0 0.0
        %484 = vmatpush1.msra.mxu0 0.0
        %485 = vmatprep.subr.mxu0 0.0
        %486 = vmatpush1.msra.mxu0 0.0
        %487 = vmatprep.subr.mxu0 0.0
        %488 = vmatpush1.msra.mxu0 0.0
        %489 = vmatprep.subr.mxu0 0.0
        %490 = vmatpush1.msra.mxu0 0.0
        %491 = vmatprep.subr.mxu0 0.0
        %492 = vmatpush1.msra.mxu0 0.0
        %493 = vmatprep.subr.mxu0 0.0
        %494 = vmatpush1.msra.mxu0 0.0
        %495 = vmatprep.subr.mxu0 0.0
        %496 = vmatpush1.msra.mxu0 0.0
        %497 = vmatprep.mubr.f32.mxu0 0.0
        %498 = vmatmul.mubr.f32.gmra.mrb[0].mxu0 %v431
        %v499 = vpop.f32.mrb[0].mxu0
        %v500 = vadd.f32 %v427, %v499
        %v501 = vpop.f32.mrb[0].mxu0
        %502 = vdwg.mxu0
        %v503 = vld [vmem:[%s3 + $0x40] sm:$0x1]
        %v504 = vlaneseq
        %v505 = vshrl.u32 %v504, 7
        %v506 = vsub.s32 0, %v505
        %v507 = vrot.slane %v503, %v506
        %v508 = vadd.f32 %v500, %v507
        %509 = vmax.xlane.f32.xlu0 %v508
        %v510 = vpop.xlane.xlu0 %509
        %v511 = vsub.f32 %v508, %v510
        %v512 = vmul.f32 %v511, 1.442695
        %v513 = vpow.pop %v512
        %514 = vadd.xlane.f32.xlu0 %v513
        %v515 = vpop.xlane.xlu0 %514
        %v516 = vrcp.pop %v515
        %v517 = vmul.f32 %v513, %v516
        %518 = vst [vmem:[%s319] sm:$0xff] %v517
        %v519 = vld [vmem:[%s2] sm:$0xff]
        %v520 = vld [vmem:[%s2 + $0x8] sm:$0xff]
        %v521 = vld [vmem:[%s2 + $0x10] sm:$0xff]
        %v522 = vld [vmem:[%s2 + $0x18] sm:$0xff]
        %v523 = vld [vmem:[%s2 + $0x20] sm:$0xff]
        %v524 = vld [vmem:[%s2 + $0x28] sm:$0xff]
        %v525 = vld [vmem:[%s2 + $0x30] sm:$0xff]
        %v526 = vld [vmem:[%s2 + $0x38] sm:$0xff]
        %v527 = vld [vmem:[%s2 + $0x40] sm:$0xff]
        %v528 = vld [vmem:[%s2 + $0x48] sm:$0xff]
        %v529 = vld [vmem:[%s2 + $0x50] sm:$0xff]
        %v530 = vld [vmem:[%s2 + $0x58] sm:$0xff]
        %v531 = vld [vmem:[%s2 + $0x60] sm:$0xff]
        %v532 = vld [vmem:[%s2 + $0x68] sm:$0xff]
        %v533 = vld [vmem:[%s2 + $0x70] sm:$0xff]
        %v534 = vld [vmem:[%s2 + $0x78] sm:$0xff]
        %535 = vmatprep.subr.mxu0 0.0
        %536 = vmatpush1.msra.mxu0 %v519
        %537 = vmatprep.subr.mxu0 0.0
        %538 = vmatpush1.msra.mxu0 %v520
        %539 = vmatprep.subr.mxu0 0.0
        %540 = vmatpush1.msra.mxu0 %v521
        %541 = vmatprep.subr.mxu0 0.0
        %542 = vmatpush1.msra.mxu0 %v522
        %543 = vmatprep.subr.mxu0 0.0
        %544 = vmatpush1.msra.mxu0 %v523
        %545 = vmatprep.subr.mxu0 0.0
        %546 = vmatpush1.msra.mxu0 %v524
        %547 = vmatprep.subr.mxu0 0.0
        %548 = vmatpush1.msra.mxu0 %v525
        %549 = vmatprep.subr.mxu0 0.0
        %550 = vmatpush1.msra.mxu0 %v526
        %551 = vmatprep.subr.mxu0 0.0
        %552 = vmatpush1.msra.mxu0 %v527
        %553 = vmatprep.subr.mxu0 0.0
        %554 = vmatpush1.msra.mxu0 %v528
        %555 = vmatprep.subr.mxu0 0.0
        %556 = vmatpush1.msra.mxu0 %v529
        %557 = vmatprep.subr.mxu0 0.0
        %558 = vmatpush1.msra.mxu0 %v530
        %559 = vmatprep.subr.mxu0 0.0
        %560 = vmatpush1.msra.mxu0 %v531
        %561 = vmatprep.subr.mxu0 0.0
        %562 = vmatpush1.msra.mxu0 %v532
        %563 = vmatprep.subr.mxu0 0.0
        %564 = vmatpush1.msra.mxu0 %v533
        %565 = vmatprep.subr.mxu0 0.0
        %566 = vmatpush1.msra.mxu0 %v534
        %567 = vmatprep.subr.mxu0 0.0
        %568 = vmatpush1.msra.mxu0 0.0
        %569 = vmatprep.subr.mxu0 0.0
        %570 = vmatpush1.msra.mxu0 0.0
        %571 = vmatprep.subr.mxu0 0.0
        %572 = vmatpush1.msra.mxu0 0.0
        %573 = vmatprep.subr.mxu0 0.0
        %574 = vmatpush1.msra.mxu0 0.0
        %575 = vmatprep.subr.mxu0 0.0
        %576 = vmatpush1.msra.mxu0 0.0
        %577 = vmatprep.subr.mxu0 0.0
        %578 = vmatpush1.msra.mxu0 0.0
        %579 = vmatprep.subr.mxu0 0.0
        %580 = vmatpush1.msra.mxu0 0.0
        %581 = vmatprep.subr.mxu0 0.0
        %582 = vmatpush1.msra.mxu0 0.0
        %583 = vmatprep.subr.mxu0 0.0
        %584 = vmatpush1.msra.mxu0 0.0
        %585 = vmatprep.subr.mxu0 0.0
        %586 = vmatpush1.msra.mxu0 0.0
        %587 = vmatprep.subr.mxu0 0.0
        %588 = vmatpush1.msra.mxu0 0.0
        %589 = vmatprep.subr.mxu0 0.0
        %590 = vmatpush1.msra.mxu0 0.0
        %591 = vmatprep.subr.mxu0 0.0
        %592 = vmatpush1.msra.mxu0 0.0
        %593 = vmatprep.subr.mxu0 0.0
        %594 = vmatpush1.msra.mxu0 0.0
        %595 = vmatprep.subr.mxu0 0.0
        %596 = vmatpush1.msra.mxu0 0.0
        %597 = vmatprep.subr.mxu0 0.0
        %598 = vmatpush1.msra.mxu0 0.0
        %599 = vmatprep.mubr.f32.mxu0 0.0
        %600 = vmatmul.mubr.f32.gmra.mrb[0].mxu0 %v517
        %v601 = vpop.f32.mrb[0].mxu0
        %v602 = vadd.f32 0.0, %v601
        %v603 = vpop.f32.mrb[0].mxu0
        %604 = vdwg.mxu0
        %v605 = vld [vmem:[%s4] sm:$0xff]
        %v606 = vld [vmem:[%s4 + $0x8] sm:$0xff]
        %v607 = vld [vmem:[%s4 + $0x10] sm:$0xff]
        %v608 = vld [vmem:[%s4 + $0x18] sm:$0xff]
        %v609 = vld [vmem:[%s4 + $0x20] sm:$0xff]
        %v610 = vld [vmem:[%s4 + $0x28] sm:$0xff]
        %v611 = vld [vmem:[%s4 + $0x30] sm:$0xff]
        %v612 = vld [vmem:[%s4 + $0x38] sm:$0xff]
        %v614 = vsel %vm356, %v602, 0
        %616 = vmatprep.subr.mxu0 0.0
        %617 = vmatpush1.msra.mxu0 %v609
        %618 = vmatprep.subr.mxu0 0.0
        %619 = vmatpush1.msra.mxu0 %v610
        %620 = vmatprep.subr.mxu0 0.0
        %621 = vmatpush1.msra.mxu0 %v611
        %622 = vmatprep.subr.mxu0 0.0
        %623 = vmatpush1.msra.mxu0 %v612
        %624 = vmatprep.subr.mxu0 0.0
        %625 = vmatpush1.msra.mxu0 0.0
        %626 = vmatprep.subr.mxu0 0.0
        %627 = vmatpush1.msra.mxu0 0.0
        %628 = vmatprep.subr.mxu0 0.0
        %629 = vmatpush1.msra.mxu0 0.0
        %630 = vmatprep.subr.mxu0 0.0
        %631 = vmatpush1.msra.mxu0 0.0
        %632 = vmatprep.subr.mxu0 0.0
        %633 = vmatpush1.msra.mxu0 0.0
        %634 = vmatprep.subr.mxu0 0.0
        %635 = vmatpush1.msra.mxu0 0.0
        %636 = vmatprep.subr.mxu0 0.0
        %637 = vmatpush1.msra.mxu0 0.0
        %638 = vmatprep.subr.mxu0 0.0
        %639 = vmatpush1.msra.mxu0 0.0
        %640 = vmatprep.subr.mxu0 0.0
        %641 = vmatpush1.msra.mxu0 0.0
        %642 = vmatprep.subr.mxu0 0.0
        %643 = vmatpush1.msra.mxu0 0.0
        %644 = vmatprep.subr.mxu0 0.0
        %645 = vmatpush1.msra.mxu0 0.0
        %646 = vmatprep.subr.mxu0 0.0
        %647 = vmatpush1.msra.mxu0 0.0
        %648 = vmatprep.subr.mxu0 0.0
        %649 = vmatpush1.msra.mxu0 0.0
        %650 = vmatprep.subr.mxu0 0.0
        %651 = vmatpush1.msra.mxu0 0.0
        %652 = vmatprep.subr.mxu0 0.0
        %653 = vmatpush1.msra.mxu0 0.0
        %654 = vmatprep.subr.mxu0 0.0
        %655 = vmatpush1.msra.mxu0 0.0
        %656 = vmatprep.subr.mxu0 0.0
        %657 = vmatpush1.msra.mxu0 0.0
        %658 = vmatprep.subr.mxu0 0.0
        %659 = vmatpush1.msra.mxu0 0.0
        %660 = vmatprep.subr.mxu0 0.0
        %661 = vmatpush1.msra.mxu0 0.0
        %662 = vmatprep.subr.mxu0 0.0
        %663 = vmatpush1.msra.mxu0 0.0
        %664 = vmatprep.subr.mxu0 0.0
        %665 = vmatpush1.msra.mxu0 0.0
        %666 = vmatprep.subr.mxu0 0.0
        %667 = vmatpush1.msra.mxu0 0.0
        %668 = vmatprep.subr.mxu0 0.0
        %669 = vmatpush1.msra.mxu0 0.0
        %670 = vmatprep.subr.mxu0 0.0
        %671 = vmatpush1.msra.mxu0 0.0
        %672 = vmatprep.subr.mxu0 0.0
        %673 = vmatpush1.msra.mxu0 0.0
        %674 = vmatprep.subr.mxu0 0.0
        %675 = vmatpush1.msra.mxu0 0.0
        %676 = vmatprep.subr.mxu0 0.0
        %677 = vmatpush1.msra.mxu0 0.0
        %678 = vmatprep.subr.mxu0 0.0
        %679 = vmatpush1.msra.mxu0 0.0
        %680 = vmatprep.mubr.f32.mxu0 0.0
        %681 = vmatmul.mubr.f32.gmra.mrb[0].mxu0 %v614
        %v682 = vpop.f32.mrb[0].mxu0
        %v683 = vadd.f32 0.0, %v682
        %v684 = vpop.f32.mrb[0].mxu0
        %685 = vdwg.mxu0
        %686 = vmatprep.subr.mxu0 0.0
        %687 = vmatpush1.msra.mxu0 %v605
        %688 = vmatprep.subr.mxu0 0.0
        %689 = vmatpush1.msra.mxu0 %v606
        %690 = vmatprep.subr.mxu0 0.0
        %691 = vmatpush1.msra.mxu0 %v607
        %692 = vmatprep.subr.mxu0 0.0
        %693 = vmatpush1.msra.mxu0 %v608
        %694 = vmatprep.subr.mxu0 0.0
        %695 = vmatpush1.msra.mxu0 0.0
        %696 = vmatprep.subr.mxu0 0.0
        %697 = vmatpush1.msra.mxu0 0.0
        %698 = vmatprep.subr.mxu0 0.0
        %699 = vmatpush1.msra.mxu0 0.0
        %700 = vmatprep.subr.mxu0 0.0
        %701 = vmatpush1.msra.mxu0 0.0
        %702 = vmatprep.subr.mxu0 0.0
        %703 = vmatpush1.msra.mxu0 0.0
        %704 = vmatprep.subr.mxu0 0.0
        %705 = vmatpush1.msra.mxu0 0.0
        %706 = vmatprep.subr.mxu0 0.0
        %707 = vmatpush1.msra.mxu0 0.0
        %708 = vmatprep.subr.mxu0 0.0
        %709 = vmatpush1.msra.mxu0 0.0
        %710 = vmatprep.subr.mxu0 0.0
        %711 = vmatpush1.msra.mxu0 0.0
        %712 = vmatprep.subr.mxu0 0.0
        %713 = vmatpush1.msra.mxu0 0.0
        %714 = vmatprep.subr.mxu0 0.0
        %715 = vmatpush1.msra.mxu0 0.0
        %716 = vmatprep.subr.mxu0 0.0
        %717 = vmatpush1.msra.mxu0 0.0
        %718 = vmatprep.subr.mxu0 0.0
        %719 = vmatpush1.msra.mxu0 0.0
        %720 = vmatprep.subr.mxu0 0.0
        %721 = vmatpush1.msra.mxu0 0.0
        %722 = vmatprep.subr.mxu0 0.0
        %723 = vmatpush1.msra.mxu0 0.0
        %724 = vmatprep.subr.mxu0 0.0
        %725 = vmatpush1.msra.mxu0 0.0
        %726 = vmatprep.subr.mxu0 0.0
        %727 = vmatpush1.msra.mxu0 0.0
        %728 = vmatprep.subr.mxu0 0.0
        %729 = vmatpush1.msra.mxu0 0.0
        %730 = vmatprep.subr.mxu0 0.0
        %731 = vmatpush1.msra.mxu0 0.0
        %732 = vmatprep.subr.mxu0 0.0
        %733 = vmatpush1.msra.mxu0 0.0
        %734 = vmatprep.subr.mxu0 0.0
        %735 = vmatpush1.msra.mxu0 0.0
        %736 = vmatprep.subr.mxu0 0.0
        %737 = vmatpush1.msra.mxu0 0.0
        %738 = vmatprep.subr.mxu0 0.0
        %739 = vmatpush1.msra.mxu0 0.0
        %740 = vmatprep.subr.mxu0 0.0
        %741 = vmatpush1.msra.mxu0 0.0
        %742 = vmatprep.subr.mxu0 0.0
        %743 = vmatpush1.msra.mxu0 0.0
        %744 = vmatprep.subr.mxu0 0.0
        %745 = vmatpush1.msra.mxu0 0.0
        %746 = vmatprep.subr.mxu0 0.0
        %747 = vmatpush1.msra.mxu0 0.0
        %748 = vmatprep.subr.mxu0 0.0
        %749 = vmatpush1.msra.mxu0 0.0
        %750 = vmatprep.mubr.f32.mxu0 0.0
        %751 = vmatmul.mubr.f32.gmra.mrb[0].mxu0 %v431
        %v752 = vpop.f32.mrb[0].mxu0
        %v753 = vadd.f32 %v683, %v752
        %v754 = vpop.f32.mrb[0].mxu0
        %755 = vdwg.mxu0
        %v756 = vld [vmem:[%s4 + $0x100] sm:$0x1]
        %v757 = vlaneseq
        %v758 = vshrl.u32 %v757, 7
        %v759 = vsub.s32 0, %v758
        %v760 = vrot.slane %v756, %v759
        %v761 = vadd.f32 %v753, %v760
        %v762 = vmax.f32 %v761, 0.0
        %v763 = vld [vmem:[%s4 + $0x40] sm:$0xff]
        %v764 = vld [vmem:[%s4 + $0x48] sm:$0xff]
        %v765 = vld [vmem:[%s4 + $0x50] sm:$0xff]
        %v766 = vld [vmem:[%s4 + $0x58] sm:$0xff]
        %v767 = vld [vmem:[%s4 + $0x101] sm:$0x1]
        %v768 = vlaneseq
        %v769 = vshrl.u32 %v768, 7
        %v770 = vsub.s32 0, %v769
        %v771 = vrot.slane %v767, %v770
        %v773 = vsel %vm356, %v762, 0
        %775 = vmatprep.subr.mxu0 0.0
        %776 = vmatpush1.msra.mxu0 %v763
        %777 = vmatprep.subr.mxu0 0.0
        %778 = vmatpush1.msra.mxu0 %v764
        %779 = vmatprep.subr.mxu0 0.0
        %780 = vmatpush1.msra.mxu0 %v765
        %781 = vmatprep.subr.mxu0 0.0
        %782 = vmatpush1.msra.mxu0 %v766
        %783 = vmatprep.subr.mxu0 0.0
        %784 = vmatpush1.msra.mxu0 0.0
        %785 = vmatprep.subr.mxu0 0.0
        %786 = vmatpush1.msra.mxu0 0.0
        %787 = vmatprep.subr.mxu0 0.0
        %788 = vmatpush1.msra.mxu0 0.0
        %789 = vmatprep.subr.mxu0 0.0
        %790 = vmatpush1.msra.mxu0 0.0
        %791 = vmatprep.subr.mxu0 0.0
        %792 = vmatpush1.msra.mxu0 0.0
        %793 = vmatprep.subr.mxu0 0.0
        %794 = vmatpush1.msra.mxu0 0.0
        %795 = vmatprep.subr.mxu0 0.0
        %796 = vmatpush1.msra.mxu0 0.0
        %797 = vmatprep.subr.mxu0 0.0
        %798 = vmatpush1.msra.mxu0 0.0
        %799 = vmatprep.subr.mxu0 0.0
        %800 = vmatpush1.msra.mxu0 0.0
        %801 = vmatprep.subr.mxu0 0.0
        %802 = vmatpush1.msra.mxu0 0.0
        %803 = vmatprep.subr.mxu0 0.0
        %804 = vmatpush1.msra.mxu0 0.0
        %805 = vmatprep.subr.mxu0 0.0
        %806 = vmatpush1.msra.mxu0 0.0
        %807 = vmatprep.subr.mxu0 0.0
        %808 = vmatpush1.msra.mxu0 0.0
        %809 = vmatprep.subr.mxu0 0.0
        %810 = vmatpush1.msra.mxu0 0.0
        %811 = vmatprep.subr.mxu0 0.0
        %812 = vmatpush1.msra.mxu0 0.0
        %813 = vmatprep.subr.mxu0 0.0
        %814 = vmatpush1.msra.mxu0 0.0
        %815 = vmatprep.subr.mxu0 0.0
        %816 = vmatpush1.msra.mxu0 0.0
        %817 = vmatprep.subr.mxu0 0.0
        %818 = vmatpush1.msra.mxu0 0.0
        %819 = vmatprep.subr.mxu0 0.0
        %820 = vmatpush1.msra.mxu0 0.0
        %821 = vmatprep.subr.mxu0 0.0
        %822 = vmatpush1.msra.mxu0 0.0
        %823 = vmatprep.subr.mxu0 0.0
        %824 = vmatpush1.msra.mxu0 0.0
        %825 = vmatprep.subr.mxu0 0.0
        %826 = vmatpush1.msra.mxu0 0.0
        %827 = vmatprep.subr.mxu0 0.0
        %828 = vmatpush1.msra.mxu0 0.0
        %829 = vmatprep.subr.mxu0 0.0
        %830 = vmatpush1.msra.mxu0 0.0
        %831 = vmatprep.subr.mxu0 0.0
        %832 = vmatpush1.msra.mxu0 0.0
        %833 = vmatprep.subr.mxu0 0.0
        %834 = vmatpush1.msra.mxu0 0.0
        %835 = vmatprep.subr.mxu0 0.0
        %836 = vmatpush1.msra.mxu0 0.0
        %837 = vmatprep.subr.mxu0 0.0
        %838 = vmatpush1.msra.mxu0 0.0
        %839 = vmatprep.mubr.f32.mxu0 0.0
        %840 = vmatmul.mubr.f32.gmra.mrb[0].mxu0 %v773
        %v841 = vpop.f32.mrb[0].mxu0
        %v842 = vadd.f32 %v771, %v841
        %v843 = vpop.f32.mrb[0].mxu0
        %844 = vdwg.mxu0
        %v845 = vld [vmem:[%s4 + $0x60] sm:$0xff]
        %v846 = vld [vmem:[%s4 + $0x68] sm:$0xff]
        %v847 = vld [vmem:[%s4 + $0x70] sm:$0xff]
        %v848 = vld [vmem:[%s4 + $0x78] sm:$0xff]
        %v849 = vld [vmem:[%s4 + $0x102] sm:$0x1]
        %v850 = vlaneseq
        %v851 = vshrl.u32 %v850, 7
        %v852 = vsub.s32 0, %v851
        %v853 = vrot.slane %v849, %v852
        %854 = vmatprep.subr.mxu0 0.0
        %855 = vmatpush1.msra.mxu0 %v845
        %856 = vmatprep.subr.mxu0 0.0
        %857 = vmatpush1.msra.mxu0 %v846
        %858 = vmatprep.subr.mxu0 0.0
        %859 = vmatpush1.msra.mxu0 %v847
        %860 = vmatprep.subr.mxu0 0.0
        %861 = vmatpush1.msra.mxu0 %v848
        %862 = vmatprep.subr.mxu0 0.0
        %863 = vmatpush1.msra.mxu0 0.0
        %864 = vmatprep.subr.mxu0 0.0
        %865 = vmatpush1.msra.mxu0 0.0
        %866 = vmatprep.subr.mxu0 0.0
        %867 = vmatpush1.msra.mxu0 0.0
        %868 = vmatprep.subr.mxu0 0.0
        %869 = vmatpush1.msra.mxu0 0.0
        %870 = vmatprep.subr.mxu0 0.0
        %871 = vmatpush1.msra.mxu0 0.0
        %872 = vmatprep.subr.mxu0 0.0
        %873 = vmatpush1.msra.mxu0 0.0
        %874 = vmatprep.subr.mxu0 0.0
        %875 = vmatpush1.msra.mxu0 0.0
        %876 = vmatprep.subr.mxu0 0.0
        %877 = vmatpush1.msra.mxu0 0.0
        %878 = vmatprep.subr.mxu0 0.0
        %879 = vmatpush1.msra.mxu0 0.0
        %880 = vmatprep.subr.mxu0 0.0
        %881 = vmatpush1.msra.mxu0 0.0
        %882 = vmatprep.subr.mxu0 0.0
        %883 = vmatpush1.msra.mxu0 0.0
        %884 = vmatprep.subr.mxu0 0.0
        %885 = vmatpush1.msra.mxu0 0.0
        %886 = vmatprep.subr.mxu0 0.0
        %887 = vmatpush1.msra.mxu0 0.0
        %888 = vmatprep.subr.mxu0 0.0
        %889 = vmatpush1.msra.mxu0 0.0
        %890 = vmatprep.subr.mxu0 0.0
        %891 = vmatpush1.msra.mxu0 0.0
        %892 = vmatprep.subr.mxu0 0.0
        %893 = vmatpush1.msra.mxu0 0.0
        %894 = vmatprep.subr.mxu0 0.0
        %895 = vmatpush1.msra.mxu0 0.0
        %896 = vmatprep.subr.mxu0 0.0
        %897 = vmatpush1.msra.mxu0 0.0
        %898 = vmatprep.subr.mxu0 0.0
        %899 = vmatpush1.msra.mxu0 0.0
        %900 = vmatprep.subr.mxu0 0.0
        %901 = vmatpush1.msra.mxu0 0.0
        %902 = vmatprep.subr.mxu0 0.0
        %903 = vmatpush1.msra.mxu0 0.0
        %904 = vmatprep.subr.mxu0 0.0
        %905 = vmatpush1.msra.mxu0 0.0
        %906 = vmatprep.subr.mxu0 0.0
        %907 = vmatpush1.msra.mxu0 0.0
        %908 = vmatprep.subr.mxu0 0.0
        %909 = vmatpush1.msra.mxu0 0.0
        %910 = vmatprep.subr.mxu0 0.0
        %911 = vmatpush1.msra.mxu0 0.0
        %912 = vmatprep.subr.mxu0 0.0
        %913 = vmatpush1.msra.mxu0 0.0
        %914 = vmatprep.subr.mxu0 0.0
        %915 = vmatpush1.msra.mxu0 0.0
        %916 = vmatprep.subr.mxu0 0.0
        %917 = vmatpush1.msra.mxu0 0.0
        %918 = vmatprep.mubr.f32.mxu0 0.0
        %919 = vmatmul.mubr.f32.gmra.mrb[0].mxu0 %v773
        %v920 = vpop.f32.mrb[0].mxu0
        %v921 = vadd.f32 %v853, %v920
        %v922 = vpop.f32.mrb[0].mxu0
        %923 = vdwg.mxu0
        %v924 = vld [vmem:[%s4 + $0x80] sm:$0xff]
        %v925 = vld [vmem:[%s4 + $0x88] sm:$0xff]
        %v926 = vld [vmem:[%s4 + $0x90] sm:$0xff]
        %v927 = vld [vmem:[%s4 + $0x98] sm:$0xff]
        %v928 = vld [vmem:[%s4 + $0x103] sm:$0x1]
        %v929 = vlaneseq
        %v930 = vshrl.u32 %v929, 7
        %v931 = vsub.s32 0, %v930
        %v932 = vrot.slane %v928, %v931
        %933 = vmatprep.subr.mxu0 0.0
        %934 = vmatpush1.msra.mxu0 %v924
        %935 = vmatprep.subr.mxu0 0.0
        %936 = vmatpush1.msra.mxu0 %v925
        %937 = vmatprep.subr.mxu0 0.0
        %938 = vmatpush1.msra.mxu0 %v926
        %939 = vmatprep.subr.mxu0 0.0
        %940 = vmatpush1.msra.mxu0 %v927
        %941 = vmatprep.subr.mxu0 0.0
        %942 = vmatpush1.msra.mxu0 0.0
        %943 = vmatprep.subr.mxu0 0.0
        %944 = vmatpush1.msra.mxu0 0.0
        %945 = vmatprep.subr.mxu0 0.0
        %946 = vmatpush1.msra.mxu0 0.0
        %947 = vmatprep.subr.mxu0 0.0
        %948 = vmatpush1.msra.mxu0 0.0
        %949 = vmatprep.subr.mxu0 0.0
        %950 = vmatpush1.msra.mxu0 0.0
        %951 = vmatprep.subr.mxu0 0.0
        %952 = vmatpush1.msra.mxu0 0.0
        %953 = vmatprep.subr.mxu0 0.0
        %954 = vmatpush1.msra.mxu0 0.0
        %955 = vmatprep.subr.mxu0 0.0
        %956 = vmatpush1.msra.mxu0 0.0
        %957 = vmatprep.subr.mxu0 0.0
        %958 = vmatpush1.msra.mxu0 0.0
        %959 = vmatprep.subr.mxu0 0.0
        %960 = vmatpush1.msra.mxu0 0.0
        %961 = vmatprep.subr.mxu0 0.0
        %962 = vmatpush1.msra.mxu0 0.0
        %963 = vmatprep.subr.mxu0 0.0
        %964 = vmatpush1.msra.mxu0 0.0
        %965 = vmatprep.subr.mxu0 0.0
        %966 = vmatpush1.msra.mxu0 0.0
        %967 = vmatprep.subr.mxu0 0.0
        %968 = vmatpush1.msra.mxu0 0.0
        %969 = vmatprep.subr.mxu0 0.0
        %970 = vmatpush1.msra.mxu0 0.0
        %971 = vmatprep.subr.mxu0 0.0
        %972 = vmatpush1.msra.mxu0 0.0
        %973 = vmatprep.subr.mxu0 0.0
        %974 = vmatpush1.msra.mxu0 0.0
        %975 = vmatprep.subr.mxu0 0.0
        %976 = vmatpush1.msra.mxu0 0.0
        %977 = vmatprep.subr.mxu0 0.0
        %978 = vmatpush1.msra.mxu0 0.0
        %979 = vmatprep.subr.mxu0 0.0
        %980 = vmatpush1.msra.mxu0 0.0
        %981 = vmatprep.subr.mxu0 0.0
        %982 = vmatpush1.msra.mxu0 0.0
        %983 = vmatprep.subr.mxu0 0.0
        %984 = vmatpush1.msra.mxu0 0.0
        %985 = vmatprep.subr.mxu0 0.0
        %986 = vmatpush1.msra.mxu0 0.0
        %987 = vmatprep.subr.mxu0 0.0
        %988 = vmatpush1.msra.mxu0 0.0
        %989 = vmatprep.subr.mxu0 0.0
        %990 = vmatpush1.msra.mxu0 0.0
        %991 = vmatprep.subr.mxu0 0.0
        %992 = vmatpush1.msra.mxu0 0.0
        %993 = vmatprep.subr.mxu0 0.0
        %994 = vmatpush1.msra.mxu0 0.0
        %995 = vmatprep.subr.mxu0 0.0
        %996 = vmatpush1.msra.mxu0 0.0
        %997 = vmatprep.mubr.f32.mxu0 0.0
        %998 = vmatmul.mubr.f32.gmra.mrb[0].mxu0 %v773
        %v999 = vpop.f32.mrb[0].mxu0
        %v1000 = vadd.f32 %v932, %v999
        %v1001 = vpop.f32.mrb[0].mxu0
        %1002 = vdwg.mxu0
        %v1003 = vld [vmem:[%s4 + $0xa0] sm:$0xff]
        %v1004 = vld [vmem:[%s4 + $0xa8] sm:$0xff]
        %v1005 = vld [vmem:[%s4 + $0xb0] sm:$0xff]
        %v1006 = vld [vmem:[%s4 + $0xb8] sm:$0xff]
        %v1007 = vld [vmem:[%s4 + $0x104] sm:$0x1]
        %v1008 = vlaneseq
        %v1009 = vshrl.u32 %v1008, 7
        %v1010 = vsub.s32 0, %v1009
        %v1011 = vrot.slane %v1007, %v1010
        %1012 = vmatprep.subr.mxu0 0.0
        %1013 = vmatpush1.msra.mxu0 %v1003
        %1014 = vmatprep.subr.mxu0 0.0
        %1015 = vmatpush1.msra.mxu0 %v1004
        %1016 = vmatprep.subr.mxu0 0.0
        %1017 = vmatpush1.msra.mxu0 %v1005
        %1018 = vmatprep.subr.mxu0 0.0
        %1019 = vmatpush1.msra.mxu0 %v1006
        %1020 = vmatprep.subr.mxu0 0.0
        %1021 = vmatpush1.msra.mxu0 0.0
        %1022 = vmatprep.subr.mxu0 0.0
        %1023 = vmatpush1.msra.mxu0 0.0
        %1024 = vmatprep.subr.mxu0 0.0
        %1025 = vmatpush1.msra.mxu0 0.0
        %1026 = vmatprep.subr.mxu0 0.0
        %1027 = vmatpush1.msra.mxu0 0.0
        %1028 = vmatprep.subr.mxu0 0.0
        %1029 = vmatpush1.msra.mxu0 0.0
        %1030 = vmatprep.subr.mxu0 0.0
        %1031 = vmatpush1.msra.mxu0 0.0
        %1032 = vmatprep.subr.mxu0 0.0
        %1033 = vmatpush1.msra.mxu0 0.0
        %1034 = vmatprep.subr.mxu0 0.0
        %1035 = vmatpush1.msra.mxu0 0.0
        %1036 = vmatprep.subr.mxu0 0.0
        %1037 = vmatpush1.msra.mxu0 0.0
        %1038 = vmatprep.subr.mxu0 0.0
        %1039 = vmatpush1.msra.mxu0 0.0
        %1040 = vmatprep.subr.mxu0 0.0
        %1041 = vmatpush1.msra.mxu0 0.0
        %1042 = vmatprep.subr.mxu0 0.0
        %1043 = vmatpush1.msra.mxu0 0.0
        %1044 = vmatprep.subr.mxu0 0.0
        %1045 = vmatpush1.msra.mxu0 0.0
        %1046 = vmatprep.subr.mxu0 0.0
        %1047 = vmatpush1.msra.mxu0 0.0
        %1048 = vmatprep.subr.mxu0 0.0
        %1049 = vmatpush1.msra.mxu0 0.0
        %1050 = vmatprep.subr.mxu0 0.0
        %1051 = vmatpush1.msra.mxu0 0.0
        %1052 = vmatprep.subr.mxu0 0.0
        %1053 = vmatpush1.msra.mxu0 0.0
        %1054 = vmatprep.subr.mxu0 0.0
        %1055 = vmatpush1.msra.mxu0 0.0
        %1056 = vmatprep.subr.mxu0 0.0
        %1057 = vmatpush1.msra.mxu0 0.0
        %1058 = vmatprep.subr.mxu0 0.0
        %1059 = vmatpush1.msra.mxu0 0.0
        %1060 = vmatprep.subr.mxu0 0.0
        %1061 = vmatpush1.msra.mxu0 0.0
        %1062 = vmatprep.subr.mxu0 0.0
        %1063 = vmatpush1.msra.mxu0 0.0
        %1064 = vmatprep.subr.mxu0 0.0
        %1065 = vmatpush1.msra.mxu0 0.0
        %1066 = vmatprep.subr.mxu0 0.0
        %1067 = vmatpush1.msra.mxu0 0.0
        %1068 = vmatprep.subr.mxu0 0.0
        %1069 = vmatpush1.msra.mxu0 0.0
        %1070 = vmatprep.subr.mxu0 0.0
        %1071 = vmatpush1.msra.mxu0 0.0
        %1072 = vmatprep.subr.mxu0 0.0
        %1073 = vmatpush1.msra.mxu0 0.0
        %1074 = vmatprep.subr.mxu0 0.0
        %1075 = vmatpush1.msra.mxu0 0.0
        %1076 = vmatprep.mubr.f32.mxu0 0.0
        %1077 = vmatmul.mubr.f32.gmra.mrb[0].mxu0 %v358
        %v1078 = vpop.f32.mrb[0].mxu0
        %v1079 = vadd.f32 %v1011, %v1078
        %v1080 = vpop.f32.mrb[0].mxu0
        %1081 = vdwg.mxu0
        %v1082 = vld [vmem:[%s4 + $0xc0] sm:$0xff]
        %v1083 = vld [vmem:[%s4 + $0xc8] sm:$0xff]
        %v1084 = vld [vmem:[%s4 + $0xd0] sm:$0xff]
        %v1085 = vld [vmem:[%s4 + $0xd8] sm:$0xff]
        %v1086 = vld [vmem:[%s4 + $0x105] sm:$0x1]
        %v1087 = vlaneseq
        %v1088 = vshrl.u32 %v1087, 7
        %v1089 = vsub.s32 0, %v1088
        %v1090 = vrot.slane %v1086, %v1089
        %1091 = vmatprep.subr.mxu0 0.0
        %1092 = vmatpush1.msra.mxu0 %v1082
        %1093 = vmatprep.subr.mxu0 0.0
        %1094 = vmatpush1.msra.mxu0 %v1083
        %1095 = vmatprep.subr.mxu0 0.0
        %1096 = vmatpush1.msra.mxu0 %v1084
        %1097 = vmatprep.subr.mxu0 0.0
        %1098 = vmatpush1.msra.mxu0 %v1085
        %1099 = vmatprep.subr.mxu0 0.0
        %1100 = vmatpush1.msra.mxu0 0.0
        %1101 = vmatprep.subr.mxu0 0.0
        %1102 = vmatpush1.msra.mxu0 0.0
        %1103 = vmatprep.subr.mxu0 0.0
        %1104 = vmatpush1.msra.mxu0 0.0
        %1105 = vmatprep.subr.mxu0 0.0
        %1106 = vmatpush1.msra.mxu0 0.0
        %1107 = vmatprep.subr.mxu0 0.0
        %1108 = vmatpush1.msra.mxu0 0.0
        %1109 = vmatprep.subr.mxu0 0.0
        %1110 = vmatpush1.msra.mxu0 0.0
        %1111 = vmatprep.subr.mxu0 0.0
        %1112 = vmatpush1.msra.mxu0 0.0
        %1113 = vmatprep.subr.mxu0 0.0
        %1114 = vmatpush1.msra.mxu0 0.0
        %1115 = vmatprep.subr.mxu0 0.0
        %1116 = vmatpush1.msra.mxu0 0.0
        %1117 = vmatprep.subr.mxu0 0.0
        %1118 = vmatpush1.msra.mxu0 0.0
        %1119 = vmatprep.subr.mxu0 0.0
        %1120 = vmatpush1.msra.mxu0 0.0
        %1121 = vmatprep.subr.mxu0 0.0
        %1122 = vmatpush1.msra.mxu0 0.0
        %1123 = vmatprep.subr.mxu0 0.0
        %1124 = vmatpush1.msra.mxu0 0.0
        %1125 = vmatprep.subr.mxu0 0.0
        %1126 = vmatpush1.msra.mxu0 0.0
        %1127 = vmatprep.subr.mxu0 0.0
        %1128 = vmatpush1.msra.mxu0 0.0
        %1129 = vmatprep.subr.mxu0 0.0
        %1130 = vmatpush1.msra.mxu0 0.0
        %1131 = vmatprep.subr.mxu0 0.0
        %1132 = vmatpush1.msra.mxu0 0.0
        %1133 = vmatprep.subr.mxu0 0.0
        %1134 = vmatpush1.msra.mxu0 0.0
        %1135 = vmatprep.subr.mxu0 0.0
        %1136 = vmatpush1.msra.mxu0 0.0
        %1137 = vmatprep.subr.mxu0 0.0
        %1138 = vmatpush1.msra.mxu0 0.0
        %1139 = vmatprep.subr.mxu0 0.0
        %1140 = vmatpush1.msra.mxu0 0.0
        %1141 = vmatprep.subr.mxu0 0.0
        %1142 = vmatpush1.msra.mxu0 0.0
        %1143 = vmatprep.subr.mxu0 0.0
        %1144 = vmatpush1.msra.mxu0 0.0
        %1145 = vmatprep.subr.mxu0 0.0
        %1146 = vmatpush1.msra.mxu0 0.0
        %1147 = vmatprep.subr.mxu0 0.0
        %1148 = vmatpush1.msra.mxu0 0.0
        %1149 = vmatprep.subr.mxu0 0.0
        %1150 = vmatpush1.msra.mxu0 0.0
        %1151 = vmatprep.subr.mxu0 0.0
        %1152 = vmatpush1.msra.mxu0 0.0
        %1153 = vmatprep.subr.mxu0 0.0
        %1154 = vmatpush1.msra.mxu0 0.0
        %1155 = vmatprep.mubr.f32.mxu0 0.0
        %1156 = vmatmul.mubr.f32.gmra.mrb[0].mxu0 %v358
        %v1157 = vpop.f32.mrb[0].mxu0
        %v1158 = vadd.f32 %v1090, %v1157
        %v1159 = vpop.f32.mrb[0].mxu0
        %1160 = vdwg.mxu0
        %v1161 = vld [vmem:[%s4 + $0xe0] sm:$0xff]
        %v1162 = vld [vmem:[%s4 + $0xe8] sm:$0xff]
        %v1163 = vld [vmem:[%s4 + $0xf0] sm:$0xff]
        %v1164 = vld [vmem:[%s4 + $0xf8] sm:$0xff]
        %v1165 = vld [vmem:[%s4 + $0x106] sm:$0x1]
        %v1166 = vlaneseq
        %v1167 = vshrl.u32 %v1166, 7
        %v1168 = vsub.s32 0, %v1167
        %v1169 = vrot.slane %v1165, %v1168
        %1170 = vmatprep.subr.mxu0 0.0
        %1171 = vmatpush1.msra.mxu0 %v1161
        %1172 = vmatprep.subr.mxu0 0.0
        %1173 = vmatpush1.msra.mxu0 %v1162
        %1174 = vmatprep.subr.mxu0 0.0
        %1175 = vmatpush1.msra.mxu0 %v1163
        %1176 = vmatprep.subr.mxu0 0.0
        %1177 = vmatpush1.msra.mxu0 %v1164
        %1178 = vmatprep.subr.mxu0 0.0
        %1179 = vmatpush1.msra.mxu0 0.0
        %1180 = vmatprep.subr.mxu0 0.0
        %1181 = vmatpush1.msra.mxu0 0.0
        %1182 = vmatprep.subr.mxu0 0.0
        %1183 = vmatpush1.msra.mxu0 0.0
        %1184 = vmatprep.subr.mxu0 0.0
        %1185 = vmatpush1.msra.mxu0 0.0
        %1186 = vmatprep.subr.mxu0 0.0
        %1187 = vmatpush1.msra.mxu0 0.0
        %1188 = vmatprep.subr.mxu0 0.0
        %1189 = vmatpush1.msra.mxu0 0.0
        %1190 = vmatprep.subr.mxu0 0.0
        %1191 = vmatpush1.msra.mxu0 0.0
        %1192 = vmatprep.subr.mxu0 0.0
        %1193 = vmatpush1.msra.mxu0 0.0
        %1194 = vmatprep.subr.mxu0 0.0
        %1195 = vmatpush1.msra.mxu0 0.0
        %1196 = vmatprep.subr.mxu0 0.0
        %1197 = vmatpush1.msra.mxu0 0.0
        %1198 = vmatprep.subr.mxu0 0.0
        %1199 = vmatpush1.msra.mxu0 0.0
        %1200 = vmatprep.subr.mxu0 0.0
        %1201 = vmatpush1.msra.mxu0 0.0
        %1202 = vmatprep.subr.mxu0 0.0
        %1203 = vmatpush1.msra.mxu0 0.0
        %1204 = vmatprep.subr.mxu0 0.0
        %1205 = vmatpush1.msra.mxu0 0.0
        %1206 = vmatprep.subr.mxu0 0.0
        %1207 = vmatpush1.msra.mxu0 0.0
        %1208 = vmatprep.subr.mxu0 0.0
        %1209 = vmatpush1.msra.mxu0 0.0
        %1210 = vmatprep.subr.mxu0 0.0
        %1211 = vmatpush1.msra.mxu0 0.0
        %1212 = vmatprep.subr.mxu0 0.0
        %1213 = vmatpush1.msra.mxu0 0.0
        %1214 = vmatprep.subr.mxu0 0.0
        %1215 = vmatpush1.msra.mxu0 0.0
        %1216 = vmatprep.subr.mxu0 0.0
        %1217 = vmatpush1.msra.mxu0 0.0
        %1218 = vmatprep.subr.mxu0 0.0
        %1219 = vmatpush1.msra.mxu0 0.0
        %1220 = vmatprep.subr.mxu0 0.0
        %1221 = vmatpush1.msra.mxu0 0.0
        %1222 = vmatprep.subr.mxu0 0.0
        %1223 = vmatpush1.msra.mxu0 0.0
        %1224 = vmatprep.subr.mxu0 0.0
        %1225 = vmatpush1.msra.mxu0 0.0
        %1226 = vmatprep.subr.mxu0 0.0
        %1227 = vmatpush1.msra.mxu0 0.0
        %1228 = vmatprep.subr.mxu0 0.0
        %1229 = vmatpush1.msra.mxu0 0.0
        %1230 = vmatprep.subr.mxu0 0.0
        %1231 = vmatpush1.msra.mxu0 0.0
        %1232 = vmatprep.subr.mxu0 0.0
        %1233 = vmatpush1.msra.mxu0 0.0
        %1234 = vmatprep.mubr.f32.mxu0 0.0
        %1235 = vmatmul.mubr.f32.gmra.mrb[0].mxu0 %v358
        %v1236 = vpop.f32.mrb[0].mxu0
        %v1237 = vadd.f32 %v1169, %v1236
        %v1238 = vpop.f32.mrb[0].mxu0
        %1239 = vdwg.mxu0
        %v1240 = vadd.f32 %v842, %v1079
        %v1241 = vxor.u32 %v1240, 2147483648
        %v1242 = vmul.f32 %v1241, 1.442695
        %v1243 = vpow.pop %v1242
        %v1244 = vadd.f32 %v1243, 1.0
        %v1245 = vrcp.pop %v1244
        %v1246 = vmul.f32 1.0, %v1245
        %v1247 = vadd.f32 %v921, %v1158
        %v1248 = vxor.u32 %v1247, 2147483648
        %v1249 = vmul.f32 %v1248, 1.442695
        %v1250 = vpow.pop %v1249
        %v1251 = vadd.f32 %v1250, 1.0
        %v1252 = vrcp.pop %v1251
        %v1253 = vmul.f32 1.0, %v1252
        %v1254 = vmul.f32 %v1246, %v1237
        %v1255 = vadd.f32 %v1000, %v1254
        %v1256 = vtanh.pop %v1255
        %v1257 = vsub.f32 1.0, %v1253
        %v1258 = vmul.f32 %v1257, %v1256
        %v1259 = vmul.f32 %v1253, %v347
        %v1260 = vadd.f32 %v1258, %v1259
        %1261 = vst.msk [vmem:[#allocation2] sm:$0xff] %vm356, %v1260
        %1262 = vst.msk [vmem:[%s326] sm:$0xff] %vm356, %v1260
        %v1263 = vld [vmem:[%s3 + $0x48] sm:$0xff]
        %v1264 = vld [vmem:[%s3 + $0x50] sm:$0xff]
        %v1265 = vld [vmem:[%s3 + $0x58] sm:$0xff]
        %v1266 = vld [vmem:[%s3 + $0x60] sm:$0xff]
        %v1267 = vld [vmem:[%s3 + $0x68] sm:$0x1]
        %v1268 = vlaneseq
        %v1269 = vshrl.u32 %v1268, 7
        %v1270 = vsub.s32 0, %v1269
        %v1271 = vrot.slane %v1267, %v1270
        %v1273 = vsel %vm356, %v1260, 0
        %1275 = vmatprep.subr.mxu0 0.0
        %1276 = vmatpush1.msra.mxu0 %v1263
        %1277 = vmatprep.subr.mxu0 0.0
        %1278 = vmatpush1.msra.mxu0 %v1264
        %1279 = vmatprep.subr.mxu0 0.0
        %1280 = vmatpush1.msra.mxu0 %v1265
        %1281 = vmatprep.subr.mxu0 0.0
        %1282 = vmatpush1.msra.mxu0 %v1266
        %1283 = vmatprep.subr.mxu0 0.0
        %1284 = vmatpush1.msra.mxu0 0.0
        %1285 = vmatprep.subr.mxu0 0.0
        %1286 = vmatpush1.msra.mxu0 0.0
        %1287 = vmatprep.subr.mxu0 0.0
        %1288 = vmatpush1.msra.mxu0 0.0
        %1289 = vmatprep.subr.mxu0 0.0
        %1290 = vmatpush1.msra.mxu0 0.0
        %1291 = vmatprep.subr.mxu0 0.0
        %1292 = vmatpush1.msra.mxu0 0.0
        %1293 = vmatprep.subr.mxu0 0.0
        %1294 = vmatpush1.msra.mxu0 0.0
        %1295 = vmatprep.subr.mxu0 0.0
        %1296 = vmatpush1.msra.mxu0 0.0
        %1297 = vmatprep.subr.mxu0 0.0
        %1298 = vmatpush1.msra.mxu0 0.0
        %1299 = vmatprep.subr.mxu0 0.0
        %1300 = vmatpush1.msra.mxu0 0.0
        %1301 = vmatprep.subr.mxu0 0.0
        %1302 = vmatpush1.msra.mxu0 0.0
        %1303 = vmatprep.subr.mxu0 0.0
        %1304 = vmatpush1.msra.mxu0 0.0
        %1305 = vmatprep.subr.mxu0 0.0
        %1306 = vmatpush1.msra.mxu0 0.0
        %1307 = vmatprep.subr.mxu0 0.0
        %1308 = vmatpush1.msra.mxu0 0.0
        %1309 = vmatprep.subr.mxu0 0.0
        %1310 = vmatpush1.msra.mxu0 0.0
        %1311 = vmatprep.subr.mxu0 0.0
        %1312 = vmatpush1.msra.mxu0 0.0
        %1313 = vmatprep.subr.mxu0 0.0
        %1314 = vmatpush1.msra.mxu0 0.0
        %1315 = vmatprep.subr.mxu0 0.0
        %1316 = vmatpush1.msra.mxu0 0.0
        %1317 = vmatprep.subr.mxu0 0.0
        %1318 = vmatpush1.msra.mxu0 0.0
        %1319 = vmatprep.subr.mxu0 0.0
        %1320 = vmatpush1.msra.mxu0 0.0
        %1321 = vmatprep.subr.mxu0 0.0
        %1322 = vmatpush1.msra.mxu0 0.0
        %1323 = vmatprep.subr.mxu0 0.0
        %1324 = vmatpush1.msra.mxu0 0.0
        %1325 = vmatprep.subr.mxu0 0.0
        %1326 = vmatpush1.msra.mxu0 0.0
        %1327 = vmatprep.subr.mxu0 0.0
        %1328 = vmatpush1.msra.mxu0 0.0
        %1329 = vmatprep.subr.mxu0 0.0
        %1330 = vmatpush1.msra.mxu0 0.0
        %1331 = vmatprep.subr.mxu0 0.0
        %1332 = vmatpush1.msra.mxu0 0.0
        %1333 = vmatprep.subr.mxu0 0.0
        %1334 = vmatpush1.msra.mxu0 0.0
        %1335 = vmatprep.subr.mxu0 0.0
        %1336 = vmatpush1.msra.mxu0 0.0
        %1337 = vmatprep.subr.mxu0 0.0
        %1338 = vmatpush1.msra.mxu0 0.0
        %1339 = vmatprep.mubr.f32.mxu0 0.0
        %1340 = vmatmul.mubr.f32.gmra.mrb[0].mxu0 %v1273
        %v1341 = vpop.f32.mrb[0].mxu0
        %v1342 = vadd.f32 %v1271, %v1341
        %v1343 = vpop.f32.mrb[0].mxu0
        %1344 = vdwg.mxu0
        %1345 = vmax.xlane.f32.xlu0 %v1342
        %v1346 = vpop.xlane.xlu0 %1345
        %v1347 = vsub.f32 %v1342, %v1346
        %v1348 = vmul.f32 %v1347, 1.442695
        %v1349 = vpow.pop %v1348
        %1350 = vadd.xlane.f32.xlu0 %v1349
        %v1351 = vpop.xlane.xlu0 %1350
        %v1352 = vlog2.pop %v1351
        %v1353 = vmul.f32 %v1352, 0.6931472
        %v1354 = vsub.f32 %v1347, %v1353
        %1355 = vst [vmem:[%s312] sm:$0xff] %v1354
        %s1356 = sand.u32 %s164, 1
        %s1357 = scalar_lea.sflag [#allocation4], %s1356
        %s1358 = sand.u32 %s164, 1
        %s1359 = smul.addr %s1358, 8
        %s1360 = scalar_lea.vmem [#allocation3], %s1359
        %s1361 = sand.u32 %s25, 1
        %s1362 = scalar_lea.sflag [#allocation6], %s1361
        %s1363 = sand.u32 %s192, 1
        %s1364 = smul.addr %s1363, 8
        %s1365 = scalar_lea.vmem [#allocation5], %s1364
        %s1366 = sand.u32 %s25, 1
        %s1367 = scalar_lea.sflag [#allocation6], %s1366
        %s1368 = sand.u32 %s218, 1
        %s1369 = smul.addr %s1368, 8
        %s1370 = scalar_lea.vmem [#allocation7], %s1369
        // Predicated region
        $region45: #{tpu_custom_call.1} parent=39 // pred_check
          %p1371 = pneg %p174
        $region46: #{tpu_custom_call.1} parent=39 // pred_check_branch
          %1373 = sbr.rel (%p1371) target = $region48
        $region47: #{tpu_custom_call.1} parent=39 // pred_region
          %s1375 = ssub.s32 128, 128
          %1376 = vsyncadd %s1357, %s1375
          %s1377 = smul.addr %s30, 2
          %s1378 = sadd.s32 %s29, %s1377
          %s1379 = smul.addr %s1378, 128
          %s1380 = scalar_lea.hbm %s5, %s1379
          %s1382 = sshll.u32 %s1360, 4
          %s1383 = int_to_ptr.vmem [resolvable:$true] %s1382
          %1385 = dma.vmem_to_hbm [thread:$0]  %s1383, 128, %s1380, %s1357
        $region48: #{tpu_custom_call.1} parent=39 // pred_fallthru
          _
        // Predicated region
        $region49: #{tpu_custom_call.1} parent=39 // pred_check
          %p1386 = pneg %p202
        $region50: #{tpu_custom_call.1} parent=39 // pred_check_branch
          %1388 = sbr.rel (%p1386) target = $region52
        $region51: #{tpu_custom_call.1} parent=39 // pred_region
          %s1390 = ssub.s32 128, 128
          %1391 = vsyncadd %s1362, %s1390
          %s1392 = smul.addr %s30, 2
          %s1393 = sadd.s32 %s29, %s1392
          %s1394 = smul.addr %s1393, 128
          %s1395 = scalar_lea.hbm %s6, %s1394
          %s1397 = sshll.u32 %s1365, 4
          %s1398 = int_to_ptr.vmem [resolvable:$true] %s1397
          %1400 = dma.vmem_to_hbm [thread:$0]  %s1398, 128, %s1395, %s1362
        $region52: #{tpu_custom_call.1} parent=39 // pred_fallthru
          _
        // Predicated region
        $region53: #{tpu_custom_call.1} parent=39 // pred_check
          %p1401 = pneg %p228
        $region54: #{tpu_custom_call.1} parent=39 // pred_check_branch
          %1403 = sbr.rel (%p1401) target = $region56
        $region55: #{tpu_custom_call.1} parent=39 // pred_region
          %s1405 = ssub.s32 128, 128
          %1406 = vsyncadd %s1367, %s1405
          %s1407 = smul.addr %s29, 128
          %s1408 = scalar_lea.hbm %s7, %s1407
          %s1410 = sshll.u32 %s1370, 4
          %s1411 = int_to_ptr.vmem [resolvable:$true] %s1410
          %1413 = dma.vmem_to_hbm [thread:$0]  %s1411, 128, %s1408, %s1367
        $region56: #{tpu_custom_call.1} parent=39 // pred_fallthru
          _
      $region40: #{tpu_custom_call.1} parent=5 // pred_fallthru
        _
      %p1414 = scmp.le.s32.totalorder 2, %s20
      // Predicated region
      $region57: #{tpu_custom_call.1} parent=5 // pred_check
        %p1415 = pneg %p1414
      $region58: #{tpu_custom_call.1} parent=5 // pred_check_branch
        %1417 = sbr.rel (%p1415) target = $region60
      $region59: #{tpu_custom_call.1} parent=5 // pred_region
        %s1418 = ssub.s32 %s20, 2
        // Predicated region
        $region61: #{tpu_custom_call.1} parent=59 // pred_check
          %p1419 = pneg %p180
        $region62: #{tpu_custom_call.1} parent=59 // pred_check_branch
          %1421 = sbr.rel (%p1419) target = $region64
        $region63: #{tpu_custom_call.1} parent=59 // pred_region
          %s1422 = sand.u32 %s165, 1
          %s1423 = scalar_lea.sflag [#allocation4], %s1422
          %s1424 = sand.u32 %s165, 1
          %s1425 = smul.addr %s1424, 8
          %s1426 = scalar_lea.vmem [#allocation3], %s1425
          %1427 = dma.done %s1423, 128
        $region64: #{tpu_custom_call.1} parent=59 // pred_fallthru
          _
        // Predicated region
        $region65: #{tpu_custom_call.1} parent=59 // pred_check
          %p1428 = pneg %p208
        $region66: #{tpu_custom_call.1} parent=59 // pred_check_branch
          %1430 = sbr.rel (%p1428) target = $region68
        $region67: #{tpu_custom_call.1} parent=59 // pred_region
          %s1431 = sand.u32 %s26, 1
          %s1432 = scalar_lea.sflag [#allocation6], %s1431
          %s1433 = sand.u32 %s193, 1
          %s1434 = smul.addr %s1433, 8
          %s1435 = scalar_lea.vmem [#allocation5], %s1434
          %1436 = dma.done %s1432, 128
        $region68: #{tpu_custom_call.1} parent=59 // pred_fallthru
          _
        // Predicated region
        $region69: #{tpu_custom_call.1} parent=59 // pred_check
          %p1437 = pneg %p234
        $region70: #{tpu_custom_call.1} parent=59 // pred_check_branch
          %1439 = sbr.rel (%p1437) target = $region72
        $region71: #{tpu_custom_call.1} parent=59 // pred_region
          %s1440 = sand.u32 %s26, 1
          %s1441 = scalar_lea.sflag [#allocation6], %s1440
          %s1442 = sand.u32 %s219, 1
          %s1443 = smul.addr %s1442, 8
          %s1444 = scalar_lea.vmem [#allocation7], %s1443
          %1445 = dma.done %s1441, 128
        $region72: #{tpu_custom_call.1} parent=59 // pred_fallthru
          _
      $region60: #{tpu_custom_call.1} parent=5 // pred_fallthru
        _
    $region6: #{tpu_custom_call.1} parent=1 // loop_footer
      %s24 = sadd.s32 1, %s20
    $region7: #{tpu_custom_call.1} parent=1 // loop_footer_branch
      %19 = sbr.rel target = $region3
    $region8: #{tpu_custom_call.1} parent=1 // loop_exit
      _
    %1446 = vsyncpa [#allocation4], 1
    %s1447 = scalar_lea.sflag [#allocation4], 1
    %1448 = vsyncpa %s1447, 1
    %1449 = vsyncpa [#allocation6], 1
    %s1450 = scalar_lea.sflag [#allocation6], 1
    %1451 = vsyncpa %s1450, 1

</llo_original>
